<compile_context>
chip_gen: v6e
topology: v6e:2x2x1
jax: 0.10.0
libtpu: 0.0.40
codegen_flags: <defaults>
</compile_context>

<pallas_src>
import numpy as np
import jax
import jax.numpy as jnp
from jax import lax
from jax.experimental import pallas as pl
from jax.experimental.pallas import tpu as pltpu

# ----- hyper-parameters (small, consistent with Encoder(seq_len, embed_size, num_layers, heads, ...)) -----
SEQ_LEN = 8
HEADS = 4
EMBED = 32
FWD_EXP = 2
NUM_LAYERS = 2
BATCH = 2
CHANNELS = SEQ_LEN * HEADS        # 32 = seq_len * heads
NH = BATCH * HEADS                # 8  = total (batch, head) groups
NC = BATCH * CHANNELS             # 64 = total rows once batch is flattened
EPS = 1e-5                        # BatchNorm1d default eps
NEG_SLOPE = 0.01                  # nn.LeakyReLU default
NEG_BIG = 1e30                    # off-block additive mask for the softmax
PREC = jax.lax.Precision.HIGHEST  # used only by the pure-JAX reference

# indices into the (6, 64, 64) constant slab
C_PM, C_PMT, C_BM, C_TILE, C_LSEL, C_SKEW = range(6)


# ----------------------------------------------------------------------------------------------
# Pallas kernel: whole EncoderBlock (block-diagonal lane-dense attention + rel-emb skew +
# BatchNorm + FFN) plus Encoder.fc_out, executed entirely in VMEM.
# In-kernel rows are ordered (batch, head, position); the permutation to/from the module's
# (batch, position, head) order is done with permutation-matrix matmuls on the MXU.
# ----------------------------------------------------------------------------------------------
def encoder_kernel(x_ref, c_ref, w32_ref, w1_ref, w2_ref, eret_ref, vb_ref, bn_ref, out_ref):
    E, C = EMBED, CHANNELS

    def mm(a, b):
        return jnp.dot(a, b, preferred_element_type=jnp.float32)

    # ---- row permutation: module (n, l, h) order -> kernel (n, h, l) order (MXU) ----
    xp = mm(c_ref[C_PM], x_ref[...])                              # (64, 32)

    # ---- Q / K / V projections (no lane-offset weight extraction needed) ----
    q = mm(xp, w32_ref[0]) + vb_ref[0:1, 0:E]
    k = mm(xp, w32_ref[1]) + vb_ref[1:2, 0:E]
    v = mm(xp, w32_ref[2]) + vb_ref[2:3, 0:E]

    # ---- lane-dense block-diagonal attention scores over the whole row stack ----
    bm = c_ref[C_BM]                                              # (64,64) 0/1 block-diag mask
    sc = jnp.einsum('qe,ke->qk', q, k, preferred_element_type=jnp.float32)   # (64, 64)
    logits = sc * (1.0 / (E ** 0.5)) + (bm - 1.0) * NEG_BIG       # off-group blocks -> -1e30
    m = jnp.max(logits, axis=-1, keepdims=True)
    p = jnp.exp(logits - m)                                       # off-block entries underflow to 0
    att = p * pl.reciprocal(jnp.sum(p, axis=-1, keepdims=True), approx=True)

    # ---- relative-embedding skew, entirely as MXU matmuls against 0/1 constants ----
    qe = mm(q, eret_ref[...]) * bm                                # (64,64) block-diag QE
    qe_exp = mm(qe, c_ref[C_TILE]) * c_ref[C_LSEL]                # tile j-values, keep row's l-block
    s_rel = mm(qe_exp, c_ref[C_SKEW]) * bm                        # per-position skew, re-block-diag
    att = att + s_rel        # added AFTER softmax — faithful to the PyTorch module

    # ---- attention output, SelfAttention.fc_out, residual, norm1 ----
    z = mm(att, v)                                                # off-block att entries are exactly 0
    z = mm(z, w32_ref[3]) + vb_ref[3:4, 0:E]

    def batchnorm(x2, gamma, beta):
        # BatchNorm1d(C) in training mode on (N, C, E): per-channel stats over (N, E), one pass.
        x3 = x2.reshape(BATCH, C, E)
        s1 = jnp.sum(jnp.sum(x3, axis=2, keepdims=True), axis=0, keepdims=True)
        s2 = jnp.sum(jnp.sum(x3 * x3, axis=2, keepdims=True), axis=0, keepdims=True)
        inv_n = 1.0 / (BATCH * E)
        mean = s1 * inv_n
        var = s2 * inv_n - mean * mean                            # biased variance
        scale = lax.rsqrt(var + EPS) * gamma.reshape(1, C, 1)
        shift = beta.reshape(1, C, 1) - mean * scale
        return (x3 * scale + shift).reshape(NC, E)

    h1 = batchnorm(z + xp, bn_ref[:, 0:1], bn_ref[:, 1:2])

    # ---- feed-forward, residual, norm2 ----
    f = mm(h1, w1_ref[...]) + vb_ref[4:5, :]
    f = jnp.where(f > 0, f, NEG_SLOPE * f)                        # LeakyReLU
    h2 = batchnorm(mm(f, w2_ref[...]) + vb_ref[5:6, 0:E] + h1,
                   bn_ref[:, 2:3], bn_ref[:, 3:4])

    # ---- Encoder.fc_out, un-permute rows back to module order, single store ----
    outk = mm(h2, w32_ref[4])
    out_ref[...] = mm(c_ref[C_PMT], outk) + vb_ref[6:7, 0:E]


def encoder_forward(x, consts, w32, w1, w2, eret, vb, bn):
    N_, C_, E_, _ = x.shape
    x2d = x.reshape(N_ * C_, E_)                                  # contiguous view, no transpose
    vmem = pl.BlockSpec(memory_space=pltpu.MemorySpace.VMEM)
    out_flat = pl.pallas_call(
        encoder_kernel,
        out_shape=jax.ShapeDtypeStruct((N_ * C_, E_), jnp.float32),
        in_specs=[vmem] * 8,
        out_specs=vmem,
    )(x2d, consts, w32, w1, w2, eret, vb, bn)
    return out_flat.reshape(N_, C_, E_)
    # TODO(synk): if BATCH grows, add a leading grid axis with dimension_semantics=("parallel",)
    # so both TensorCores are used on v7x; unnecessary at this toy size.


encoder_forward = jax.jit(encoder_forward)


# ----------------------------------------------------------------------------------------------
# Constant / parameter construction.
# ----------------------------------------------------------------------------------------------
def build_consts():
    """(6, 64, 64) slab: [Pm, Pm^T, block-diag mask, tile, l-select, skew] matrices."""
    L, H, R = SEQ_LEN, HEADS, NC
    idx = np.arange(R)
    n_k = idx // (H * L)
    h_k = (idx % (H * L)) // L
    l_k = idx % L
    nat = n_k * (L * H) + l_k * H + h_k                 # natural row feeding kernel row `idx`
    pm = np.zeros((R, R), np.float32)
    pm[idx, nat] = 1.0
    grp = idx // L
    bm = (grp[:, None] == grp[None, :]).astype(np.float32)            # same (n, h) group
    tile = ((idx[:, None] % L) == (idx[None, :] % L)).astype(np.float32)
    lsel = ((idx[None, :] // L) == (idx[:, None] % L)).astype(np.float32)
    # p3[l, j, c] = 1 iff j == L-1-l+c and c <= l  ==  _mask_positions + _skew of the module.
    p3 = np.zeros((L, L, L), np.float32)
    for l in range(L):
        for c in range(l + 1):
            p3[l, L - 1 - l + c, c] = 1.0
    skew = p3[(idx // L)[:, None], (idx % L)[:, None], (idx % L)[None, :]].astype(np.float32)
    return jnp.asarray(np.stack([pm, pm.T, bm, tile, lsel, skew], axis=0))


def linear_params(key, fan_in, fan_out):
    kw, kb = jax.random.split(key)
    limit = np.sqrt(6.0 / (fan_in + fan_out))                 # xavier_uniform
    w_t = jax.random.uniform(kw, (fan_in, fan_out), jnp.float32, -limit, limit)
    bound = 1.0 / np.sqrt(fan_in)
    b = jax.random.uniform(kb, (1, fan_out), jnp.float32, -bound, bound)
    return w_t, b


def make_layer_params(key):
    ks = jax.random.split(key, 7)
    wq, bq = linear_params(ks[0], EMBED, EMBED)
    wk, bk = linear_params(ks[1], EMBED, EMBED)
    wv, bv = linear_params(ks[2], EMBED, EMBED)
    wfc, bfc = linear_params(ks[3], EMBED, EMBED)
    erel = jax.random.normal(ks[4], (HEADS, SEQ_LEN, EMBED), jnp.float32)   # nn.Parameter randn
    w1, b1 = linear_params(ks[5], EMBED, FWD_EXP * EMBED)
    w2, b2 = linear_params(ks[6], FWD_EXP * EMBED, EMBED)
    g1 = jnp.ones((CHANNELS,), jnp.float32)
    be1 = jnp.zeros((CHANNELS,), jnp.float32)
    g2 = jnp.ones((CHANNELS,), jnp.float32)
    be2 = jnp.zeros((CHANNELS,), jnp.float32)
    return dict(wq=wq, bq=bq, wk=wk, bk=bk, wv=wv, bv=bv, wfc=wfc, bfc=bfc, erel=erel,
                w1=w1, b1=b1, w2=w2, b2=b2, g1=g1, be1=be1, g2=g2, be2=be2)


def pack_params(layer, enc_fc):
    L, H, E, C = SEQ_LEN, HEADS, EMBED, CHANNELS
    wo, bo = enc_fc
    consts = build_consts()
    w32 = jnp.stack([layer['wq'], layer['wk'], layer['wv'], layer['wfc'], wo], axis=0)  # (5,32,32)

    erel = np.asarray(layer['erel']).reshape(H * L, E)            # rows (h, l)
    eret = jnp.asarray(np.tile(erel, (BATCH, 1)).T.copy())        # (E, NC): columns in (n,h,l) order

    vb = np.zeros((8, FWD_EXP * E), np.float32)                   # one bias vector per row
    vb[0, :E] = np.asarray(layer['bq'])[0]
    vb[1, :E] = np.asarray(layer['bk'])[0]
    vb[2, :E] = np.asarray(layer['bv'])[0]
    vb[3, :E] = np.asarray(layer['bfc'])[0]
    vb[4, :] = np.asarray(layer['b1'])[0]
    vb[5, :E] = np.asarray(layer['b2'])[0]
    vb[6, :E] = np.asarray(bo)[0]

    def perm(vv):   # per-channel params: module's (l, h) order -> kernel's (h, l) order
        return np.asarray(vv).reshape(L, H).T.reshape(C)
    bn = np.zeros((C, 8), np.float32)
    bn[:, 0] = perm(layer['g1'])
    bn[:, 1] = perm(layer['be1'])
    bn[:, 2] = perm(layer['g2'])
    bn[:, 3] = perm(layer['be2'])

    return (consts, w32, layer['w1'], layer['w2'], eret, jnp.asarray(vb), jnp.asarray(bn))


# ----------------------------------------------------------------------------------------------
# Pure-JAX reference (literal translation of the PyTorch forward) for verification.
# ----------------------------------------------------------------------------------------------
def encoder_reference(x, layer, enc_fc):
    x2d = x[:, :, :, 0]
    N_, C_, E_ = x2d.shape
    L, H = SEQ_LEN, HEADS

    def lin(a, wt, b):
        return jnp.matmul(a, wt, precision=PREC) + b[0]

    v = lin(x2d, layer['wv'], layer['bv']).reshape(N_, L, H, E_)
    k = lin(x2d, layer['wk'], layer['bk']).reshape(N_, L, H, E_)
    q = lin(x2d, layer['wq'], layer['bq']).reshape(N_, L, H, E_)

    qe = jnp.matmul(q.transpose(0, 2, 1, 3), layer['erel'].transpose(0, 2, 1), precision=PREC)
    mask = jnp.flip(jnp.triu(jnp.ones((L, L), jnp.float32), 1), axis=1)
    qe = jnp.where(mask == 1, 0.0, qe)                         # _mask_positions
    padded = jnp.pad(qe, ((0, 0), (0, 0), (0, 0), (1, 0)))     # _skew
    s = padded.reshape(N_, H, L + 1, L)[:, :, 1:, :]

    qk = jnp.einsum('nqhd,nkhd->nhqk', q, k, precision=PREC)
    attention = jax.nn.softmax(qk / np.sqrt(E_), axis=3) + s
    z = jnp.einsum('nhql,nlhd->nqhd', attention, v, precision=PREC).reshape(N_, L * H, E_)
    z = lin(z, layer['wfc'], layer['bfc'])

    r1 = z + x2d
    m1 = r1.mean(axis=(0, 2), keepdims=True)
    v1 = ((r1 - m1) ** 2).mean(axis=(0, 2), keepdims=True)
    h1 = (r1 - m1) / jnp.sqrt(v1 + EPS) * layer['g1'][None, :, None] + layer['be1'][None, :, None]

    f = lin(h1, layer['w1'], layer['b1'])
    f = jnp.where(f > 0, f, NEG_SLOPE * f)
    f = lin(f, layer['w2'], layer['b2'])
    r2 = f + h1
    m2 = r2.mean(axis=(0, 2), keepdims=True)
    v2 = ((r2 - m2) ** 2).mean(axis=(0, 2), keepdims=True)
    h2 = (r2 - m2) / jnp.sqrt(v2 + EPS) * layer['g2'][None, :, None] + layer['be2'][None, :, None]

    wo, bo = enc_fc
    return lin(h2, wo, bo)


if __name__ == "__main__":
    key = jax.random.PRNGKey(0)
    k_x, k_layers, k_fc = jax.random.split(key, 3)

    # input x: (N, seq_len*heads, embed_size, 1)
    x = jax.random.normal(k_x, (BATCH, CHANNELS, EMBED, 1), jnp.float32)

    # Encoder builds num_layers EncoderBlocks, but its forward applies each one to the ORIGINAL
    # input and overwrites `out`, so only the LAST block affects the output — reproduced here.
    layer_keys = jax.random.split(k_layers, NUM_LAYERS)
    layers = [make_layer_params(kk) for kk in layer_keys]
    last = layers[-1]
    wo, bo = linear_params(k_fc, EMBED, EMBED)                 # Encoder.fc_out

    args = pack_params(last, (wo, bo))

    out = encoder_forward(x, *args)
    out = jax.block_until_ready(out)

    ref = encoder_reference(x, last, (wo, bo))
    np.testing.assert_allclose(np.asarray(out), np.asarray(ref), rtol=5e-2, atol=5e-2)

    print("KERNEL_OK")
</pallas_src>

<mosaic_0001>
module attributes {stable_mosaic.version = 11 : i64} {
  func.func @encoder_kernel(%arg0: memref<64x32xf32, #tpu.memory_space<vmem>>, %arg1: memref<6x64x64xf32, #tpu.memory_space<vmem>>, %arg2: memref<5x32x32xf32, #tpu.memory_space<vmem>>, %arg3: memref<32x64xf32, #tpu.memory_space<vmem>>, %arg4: memref<64x32xf32, #tpu.memory_space<vmem>>, %arg5: memref<32x64xf32, #tpu.memory_space<vmem>>, %arg6: memref<8x64xf32, #tpu.memory_space<vmem>>, %arg7: memref<32x8xf32, #tpu.memory_space<vmem>>, %arg8: memref<64x32xf32, #tpu.memory_space<vmem>>) attributes {dimension_semantics = [], scalar_prefetch = 0 : i64, scratch_operands = 0 : i64, tpu.core_type = #tpu.core_type<tc>} {
    %c0 = arith.constant 0 : index
    %c0_0 = arith.constant 0 : index
    %c0_1 = arith.constant 0 : index
    %0 = vector.load %arg1[%c0, %c0_0, %c0_1] : memref<6x64x64xf32, #tpu.memory_space<vmem>>, vector<1x64x64xf32>
    %1 = vector.shape_cast %0 : vector<1x64x64xf32> to vector<64x64xf32>
    %c0_2 = arith.constant 0 : index
    %c0_3 = arith.constant 0 : index
    %2 = vector.load %arg0[%c0_2, %c0_3] : memref<64x32xf32, #tpu.memory_space<vmem>>, vector<64x32xf32>
    %cst = arith.constant dense<0.000000e+00> : vector<64x32xf32>
    %3 = tpu.matmul %1, %2, %cst {dimension_numbers = #tpu.dot_dimension_numbers<[1], [0], [0], [1], [0, 0, 1, 1], [], []>} : vector<64x64xf32>, vector<64x32xf32>, vector<64x32xf32> -> vector<64x32xf32>
    %c0_4 = arith.constant 0 : index
    %c0_5 = arith.constant 0 : index
    %c0_6 = arith.constant 0 : index
    %4 = vector.load %arg2[%c0_4, %c0_5, %c0_6] : memref<5x32x32xf32, #tpu.memory_space<vmem>>, vector<1x32x32xf32>
    %5 = vector.shape_cast %4 : vector<1x32x32xf32> to vector<32x32xf32>
    %cst_7 = arith.constant dense<0.000000e+00> : vector<64x32xf32>
    %6 = tpu.matmul %3, %5, %cst_7 {dimension_numbers = #tpu.dot_dimension_numbers<[1], [0], [0], [1], [0, 0, 1, 1], [], []>} : vector<64x32xf32>, vector<32x32xf32>, vector<64x32xf32> -> vector<64x32xf32>
    %c0_8 = arith.constant 0 : index
    %c0_9 = arith.constant 0 : index
    %7 = vector.load %arg6[%c0_8, %c0_9] : memref<8x64xf32, #tpu.memory_space<vmem>>, vector<1x32xf32>
    %8 = vector.broadcast %7 : vector<1x32xf32> to vector<64x32xf32>
    %9 = arith.addf %6, %8 : vector<64x32xf32>
    %c1 = arith.constant 1 : index
    %c0_10 = arith.constant 0 : index
    %c0_11 = arith.constant 0 : index
    %10 = vector.load %arg2[%c1, %c0_10, %c0_11] : memref<5x32x32xf32, #tpu.memory_space<vmem>>, vector<1x32x32xf32>
    %11 = vector.shape_cast %10 : vector<1x32x32xf32> to vector<32x32xf32>
    %cst_12 = arith.constant dense<0.000000e+00> : vector<64x32xf32>
    %12 = tpu.matmul %3, %11, %cst_12 {dimension_numbers = #tpu.dot_dimension_numbers<[1], [0], [0], [1], [0, 0, 1, 1], [], []>} : vector<64x32xf32>, vector<32x32xf32>, vector<64x32xf32> -> vector<64x32xf32>
    %c1_13 = arith.constant 1 : index
    %c0_14 = arith.constant 0 : index
    %13 = vector.load %arg6[%c1_13, %c0_14] : memref<8x64xf32, #tpu.memory_space<vmem>>, vector<1x32xf32>
    %14 = vector.broadcast %13 : vector<1x32xf32> to vector<64x32xf32>
    %15 = arith.addf %12, %14 : vector<64x32xf32>
    %c2 = arith.constant 2 : index
    %c0_15 = arith.constant 0 : index
    %c0_16 = arith.constant 0 : index
    %16 = vector.load %arg2[%c2, %c0_15, %c0_16] : memref<5x32x32xf32, #tpu.memory_space<vmem>>, vector<1x32x32xf32>
    %17 = vector.shape_cast %16 : vector<1x32x32xf32> to vector<32x32xf32>
    %cst_17 = arith.constant dense<0.000000e+00> : vector<64x32xf32>
    %18 = tpu.matmul %3, %17, %cst_17 {dimension_numbers = #tpu.dot_dimension_numbers<[1], [0], [0], [1], [0, 0, 1, 1], [], []>} : vector<64x32xf32>, vector<32x32xf32>, vector<64x32xf32> -> vector<64x32xf32>
    %c2_18 = arith.constant 2 : index
    %c0_19 = arith.constant 0 : index
    %19 = vector.load %arg6[%c2_18, %c0_19] : memref<8x64xf32, #tpu.memory_space<vmem>>, vector<1x32xf32>
    %20 = vector.broadcast %19 : vector<1x32xf32> to vector<64x32xf32>
    %21 = arith.addf %18, %20 : vector<64x32xf32>
    %c2_20 = arith.constant 2 : index
    %c0_21 = arith.constant 0 : index
    %c0_22 = arith.constant 0 : index
    %22 = vector.load %arg1[%c2_20, %c0_21, %c0_22] : memref<6x64x64xf32, #tpu.memory_space<vmem>>, vector<1x64x64xf32>
    %23 = vector.shape_cast %22 : vector<1x64x64xf32> to vector<64x64xf32>
    "tpu.trace_start"() <{level = 10 : i32, message = "qe,ke->qk"}> : () -> ()
    %cst_23 = arith.constant dense<0.000000e+00> : vector<64x64xf32>
    %24 = tpu.matmul %9, %15, %cst_23 {dimension_numbers = #tpu.dot_dimension_numbers<[1], [1], [0], [0], [0, 0, 1, 0], [], []>} : vector<64x32xf32>, vector<64x32xf32>, vector<64x64xf32> -> vector<64x64xf32>
    "tpu.trace_stop"() : () -> ()
    %cst_24 = arith.constant 0.176776692 : f32
    %25 = vector.broadcast %cst_24 : f32 to vector<64x64xf32>
    %26 = arith.mulf %24, %25 : vector<64x64xf32>
    %cst_25 = arith.constant 1.000000e+00 : f32
    %27 = vector.broadcast %cst_25 : f32 to vector<64x64xf32>
    %28 = arith.subf %23, %27 : vector<64x64xf32>
    %cst_26 = arith.constant 1.000000e+30 : f32
    %29 = vector.broadcast %cst_26 : f32 to vector<64x64xf32>
    %30 = arith.mulf %28, %29 : vector<64x64xf32>
    %31 = arith.addf %26, %30 : vector<64x64xf32>
    %cst_27 = arith.constant dense<0xFF800000> : vector<64xf32>
    %32 = vector.multi_reduction <maximumf>, %31, %cst_27 [1] : vector<64x64xf32> to vector<64xf32>
    %33 = vector.shape_cast %32 : vector<64xf32> to vector<64x1xf32>
    %34 = vector.broadcast %33 : vector<64x1xf32> to vector<64x64xf32>
    %35 = arith.subf %31, %34 : vector<64x64xf32>
    %36 = math.exp %35 : vector<64x64xf32>
    %cst_28 = arith.constant dense<0.000000e+00> : vector<64xf32>
    %37 = vector.multi_reduction <add>, %36, %cst_28 [1] : vector<64x64xf32> to vector<64xf32>
    %38 = vector.shape_cast %37 : vector<64xf32> to vector<64x1xf32>
    %39 = tpu.reciprocal %38 {approx = true} : vector<64x1xf32> -> vector<64x1xf32>
    %40 = vector.broadcast %39 : vector<64x1xf32> to vector<64x64xf32>
    %41 = arith.mulf %36, %40 : vector<64x64xf32>
    %c0_29 = arith.constant 0 : index
    %c0_30 = arith.constant 0 : index
    %42 = vector.load %arg5[%c0_29, %c0_30] : memref<32x64xf32, #tpu.memory_space<vmem>>, vector<32x64xf32>
    %cst_31 = arith.constant dense<0.000000e+00> : vector<64x64xf32>
    %43 = tpu.matmul %9, %42, %cst_31 {dimension_numbers = #tpu.dot_dimension_numbers<[1], [0], [0], [1], [0, 0, 1, 1], [], []>} : vector<64x32xf32>, vector<32x64xf32>, vector<64x64xf32> -> vector<64x64xf32>
    %44 = arith.mulf %43, %23 : vector<64x64xf32>
    %c3 = arith.constant 3 : index
    %c0_32 = arith.constant 0 : index
    %c0_33 = arith.constant 0 : index
    %45 = vector.load %arg1[%c3, %c0_32, %c0_33] : memref<6x64x64xf32, #tpu.memory_space<vmem>>, vector<1x64x64xf32>
    %46 = vector.shape_cast %45 : vector<1x64x64xf32> to vector<64x64xf32>
    %cst_34 = arith.constant dense<0.000000e+00> : vector<64x64xf32>
    %47 = tpu.matmul %44, %46, %cst_34 {dimension_numbers = #tpu.dot_dimension_numbers<[1], [0], [0], [1], [0, 0, 1, 1], [], []>} : vector<64x64xf32>, vector<64x64xf32>, vector<64x64xf32> -> vector<64x64xf32>
    %c4 = arith.constant 4 : index
    %c0_35 = arith.constant 0 : index
    %c0_36 = arith.constant 0 : index
    %48 = vector.load %arg1[%c4, %c0_35, %c0_36] : memref<6x64x64xf32, #tpu.memory_space<vmem>>, vector<1x64x64xf32>
    %49 = vector.shape_cast %48 : vector<1x64x64xf32> to vector<64x64xf32>
    %50 = arith.mulf %47, %49 : vector<64x64xf32>
    %c5 = arith.constant 5 : index
    %c0_37 = arith.constant 0 : index
    %c0_38 = arith.constant 0 : index
    %51 = vector.load %arg1[%c5, %c0_37, %c0_38] : memref<6x64x64xf32, #tpu.memory_space<vmem>>, vector<1x64x64xf32>
    %52 = vector.shape_cast %51 : vector<1x64x64xf32> to vector<64x64xf32>
    %cst_39 = arith.constant dense<0.000000e+00> : vector<64x64xf32>
    %53 = tpu.matmul %50, %52, %cst_39 {dimension_numbers = #tpu.dot_dimension_numbers<[1], [0], [0], [1], [0, 0, 1, 1], [], []>} : vector<64x64xf32>, vector<64x64xf32>, vector<64x64xf32> -> vector<64x64xf32>
    %54 = arith.mulf %53, %23 : vector<64x64xf32>
    %55 = arith.addf %41, %54 : vector<64x64xf32>
    %cst_40 = arith.constant dense<0.000000e+00> : vector<64x32xf32>
    %56 = tpu.matmul %55, %21, %cst_40 {dimension_numbers = #tpu.dot_dimension_numbers<[1], [0], [0], [1], [0, 0, 1, 1], [], []>} : vector<64x64xf32>, vector<64x32xf32>, vector<64x32xf32> -> vector<64x32xf32>
    %c3_41 = arith.constant 3 : index
    %c0_42 = arith.constant 0 : index
    %c0_43 = arith.constant 0 : index
    %57 = vector.load %arg2[%c3_41, %c0_42, %c0_43] : memref<5x32x32xf32, #tpu.memory_space<vmem>>, vector<1x32x32xf32>
    %58 = vector.shape_cast %57 : vector<1x32x32xf32> to vector<32x32xf32>
    %cst_44 = arith.constant dense<0.000000e+00> : vector<64x32xf32>
    %59 = tpu.matmul %56, %58, %cst_44 {dimension_numbers = #tpu.dot_dimension_numbers<[1], [0], [0], [1], [0, 0, 1, 1], [], []>} : vector<64x32xf32>, vector<32x32xf32>, vector<64x32xf32> -> vector<64x32xf32>
    %c3_45 = arith.constant 3 : index
    %c0_46 = arith.constant 0 : index
    %60 = vector.load %arg6[%c3_45, %c0_46] : memref<8x64xf32, #tpu.memory_space<vmem>>, vector<1x32xf32>
    %61 = vector.broadcast %60 : vector<1x32xf32> to vector<64x32xf32>
    %62 = arith.addf %59, %61 : vector<64x32xf32>
    %63 = arith.addf %62, %3 : vector<64x32xf32>
    %c0_47 = arith.constant 0 : index
    %c0_48 = arith.constant 0 : index
    %64 = vector.load %arg7[%c0_47, %c0_48] : memref<32x8xf32, #tpu.memory_space<vmem>>, vector<32x1xf32>
    %c0_49 = arith.constant 0 : index
    %c1_50 = arith.constant 1 : index
    %65 = vector.load %arg7[%c0_49, %c1_50] : memref<32x8xf32, #tpu.memory_space<vmem>>, vector<32x1xf32>
    %66 = vector.shape_cast %63 : vector<64x32xf32> to vector<2x32x32xf32>
    %cst_51 = arith.constant dense<0.000000e+00> : vector<2x32xf32>
    %67 = vector.multi_reduction <add>, %66, %cst_51 [2] : vector<2x32x32xf32> to vector<2x32xf32>
    %68 = vector.shape_cast %67 : vector<2x32xf32> to vector<2x32x1xf32>
    %cst_52 = arith.constant dense<0.000000e+00> : vector<32x1xf32>
    %69 = vector.multi_reduction <add>, %68, %cst_52 [0] : vector<2x32x1xf32> to vector<32x1xf32>
    %70 = vector.shape_cast %69 : vector<32x1xf32> to vector<1x32x1xf32>
    %71 = arith.mulf %66, %66 : vector<2x32x32xf32>
    %cst_53 = arith.constant dense<0.000000e+00> : vector<2x32xf32>
    %72 = vector.multi_reduction <add>, %71, %cst_53 [2] : vector<2x32x32xf32> to vector<2x32xf32>
    %73 = vector.shape_cast %72 : vector<2x32xf32> to vector<2x32x1xf32>
    %cst_54 = arith.constant dense<0.000000e+00> : vector<32x1xf32>
    %74 = vector.multi_reduction <add>, %73, %cst_54 [0] : vector<2x32x1xf32> to vector<32x1xf32>
    %75 = vector.shape_cast %74 : vector<32x1xf32> to vector<1x32x1xf32>
    %cst_55 = arith.constant 1.562500e-02 : f32
    %76 = vector.broadcast %cst_55 : f32 to vector<1x32x1xf32>
    %77 = arith.mulf %70, %76 : vector<1x32x1xf32>
    %cst_56 = arith.constant 1.562500e-02 : f32
    %78 = vector.broadcast %cst_56 : f32 to vector<1x32x1xf32>
    %79 = arith.mulf %75, %78 : vector<1x32x1xf32>
    %80 = arith.mulf %77, %77 : vector<1x32x1xf32>
    %81 = arith.subf %79, %80 : vector<1x32x1xf32>
    %cst_57 = arith.constant 9.99999974E-6 : f32
    %82 = vector.broadcast %cst_57 : f32 to vector<1x32x1xf32>
    %83 = arith.addf %81, %82 : vector<1x32x1xf32>
    %84 = math.rsqrt %83 : vector<1x32x1xf32>
    %85 = vector.shape_cast %64 : vector<32x1xf32> to vector<1x32x1xf32>
    %86 = arith.mulf %84, %85 : vector<1x32x1xf32>
    %87 = vector.shape_cast %65 : vector<32x1xf32> to vector<1x32x1xf32>
    %88 = arith.mulf %77, %86 : vector<1x32x1xf32>
    %89 = arith.subf %87, %88 : vector<1x32x1xf32>
    %90 = vector.broadcast %86 : vector<1x32x1xf32> to vector<2x32x32xf32>
    %91 = arith.mulf %66, %90 : vector<2x32x32xf32>
    %92 = vector.broadcast %89 : vector<1x32x1xf32> to vector<2x32x32xf32>
    %93 = arith.addf %91, %92 : vector<2x32x32xf32>
    %94 = vector.shape_cast %93 : vector<2x32x32xf32> to vector<64x32xf32>
    %c0_58 = arith.constant 0 : index
    %c0_59 = arith.constant 0 : index
    %95 = vector.load %arg3[%c0_58, %c0_59] : memref<32x64xf32, #tpu.memory_space<vmem>>, vector<32x64xf32>
    %cst_60 = arith.constant dense<0.000000e+00> : vector<64x64xf32>
    %96 = tpu.matmul %94, %95, %cst_60 {dimension_numbers = #tpu.dot_dimension_numbers<[1], [0], [0], [1], [0, 0, 1, 1], [], []>} : vector<64x32xf32>, vector<32x64xf32>, vector<64x64xf32> -> vector<64x64xf32>
    %c4_61 = arith.constant 4 : index
    %c0_62 = arith.constant 0 : index
    %97 = vector.load %arg6[%c4_61, %c0_62] : memref<8x64xf32, #tpu.memory_space<vmem>>, vector<1x64xf32>
    %98 = vector.broadcast %97 : vector<1x64xf32> to vector<64x64xf32>
    %99 = arith.addf %96, %98 : vector<64x64xf32>
    %cst_63 = arith.constant 0.000000e+00 : f32
    %100 = vector.broadcast %cst_63 : f32 to vector<64x64xf32>
    %101 = arith.cmpf ogt, %99, %100 : vector<64x64xf32>
    %cst_64 = arith.constant 0.00999999977 : f32
    %102 = vector.broadcast %cst_64 : f32 to vector<64x64xf32>
    %103 = arith.mulf %102, %99 : vector<64x64xf32>
    %104 = arith.select %101, %99, %103 : vector<64x64xi1>, vector<64x64xf32>
    %c0_65 = arith.constant 0 : index
    %c0_66 = arith.constant 0 : index
    %105 = vector.load %arg4[%c0_65, %c0_66] : memref<64x32xf32, #tpu.memory_space<vmem>>, vector<64x32xf32>
    %cst_67 = arith.constant dense<0.000000e+00> : vector<64x32xf32>
    %106 = tpu.matmul %104, %105, %cst_67 {dimension_numbers = #tpu.dot_dimension_numbers<[1], [0], [0], [1], [0, 0, 1, 1], [], []>} : vector<64x64xf32>, vector<64x32xf32>, vector<64x32xf32> -> vector<64x32xf32>
    %c5_68 = arith.constant 5 : index
    %c0_69 = arith.constant 0 : index
    %107 = vector.load %arg6[%c5_68, %c0_69] : memref<8x64xf32, #tpu.memory_space<vmem>>, vector<1x32xf32>
    %108 = vector.broadcast %107 : vector<1x32xf32> to vector<64x32xf32>
    %109 = arith.addf %106, %108 : vector<64x32xf32>
    %110 = arith.addf %109, %94 : vector<64x32xf32>
    %c0_70 = arith.constant 0 : index
    %c2_71 = arith.constant 2 : index
    %111 = vector.load %arg7[%c0_70, %c2_71] : memref<32x8xf32, #tpu.memory_space<vmem>>, vector<32x1xf32>
    %c0_72 = arith.constant 0 : index
    %c3_73 = arith.constant 3 : index
    %112 = vector.load %arg7[%c0_72, %c3_73] : memref<32x8xf32, #tpu.memory_space<vmem>>, vector<32x1xf32>
    %113 = vector.shape_cast %110 : vector<64x32xf32> to vector<2x32x32xf32>
    %cst_74 = arith.constant dense<0.000000e+00> : vector<2x32xf32>
    %114 = vector.multi_reduction <add>, %113, %cst_74 [2] : vector<2x32x32xf32> to vector<2x32xf32>
    %115 = vector.shape_cast %114 : vector<2x32xf32> to vector<2x32x1xf32>
    %cst_75 = arith.constant dense<0.000000e+00> : vector<32x1xf32>
    %116 = vector.multi_reduction <add>, %115, %cst_75 [0] : vector<2x32x1xf32> to vector<32x1xf32>
    %117 = vector.shape_cast %116 : vector<32x1xf32> to vector<1x32x1xf32>
    %118 = arith.mulf %113, %113 : vector<2x32x32xf32>
    %cst_76 = arith.constant dense<0.000000e+00> : vector<2x32xf32>
    %119 = vector.multi_reduction <add>, %118, %cst_76 [2] : vector<2x32x32xf32> to vector<2x32xf32>
    %120 = vector.shape_cast %119 : vector<2x32xf32> to vector<2x32x1xf32>
    %cst_77 = arith.constant dense<0.000000e+00> : vector<32x1xf32>
    %121 = vector.multi_reduction <add>, %120, %cst_77 [0] : vector<2x32x1xf32> to vector<32x1xf32>
    %122 = vector.shape_cast %121 : vector<32x1xf32> to vector<1x32x1xf32>
    %cst_78 = arith.constant 1.562500e-02 : f32
    %123 = vector.broadcast %cst_78 : f32 to vector<1x32x1xf32>
    %124 = arith.mulf %117, %123 : vector<1x32x1xf32>
    %cst_79 = arith.constant 1.562500e-02 : f32
    %125 = vector.broadcast %cst_79 : f32 to vector<1x32x1xf32>
    %126 = arith.mulf %122, %125 : vector<1x32x1xf32>
    %127 = arith.mulf %124, %124 : vector<1x32x1xf32>
    %128 = arith.subf %126, %127 : vector<1x32x1xf32>
    %cst_80 = arith.constant 9.99999974E-6 : f32
    %129 = vector.broadcast %cst_80 : f32 to vector<1x32x1xf32>
    %130 = arith.addf %128, %129 : vector<1x32x1xf32>
    %131 = math.rsqrt %130 : vector<1x32x1xf32>
    %132 = vector.shape_cast %111 : vector<32x1xf32> to vector<1x32x1xf32>
    %133 = arith.mulf %131, %132 : vector<1x32x1xf32>
    %134 = vector.shape_cast %112 : vector<32x1xf32> to vector<1x32x1xf32>
    %135 = arith.mulf %124, %133 : vector<1x32x1xf32>
    %136 = arith.subf %134, %135 : vector<1x32x1xf32>
    %137 = vector.broadcast %133 : vector<1x32x1xf32> to vector<2x32x32xf32>
    %138 = arith.mulf %113, %137 : vector<2x32x32xf32>
    %139 = vector.broadcast %136 : vector<1x32x1xf32> to vector<2x32x32xf32>
    %140 = arith.addf %138, %139 : vector<2x32x32xf32>
    %141 = vector.shape_cast %140 : vector<2x32x32xf32> to vector<64x32xf32>
    %c4_81 = arith.constant 4 : index
    %c0_82 = arith.constant 0 : index
    %c0_83 = arith.constant 0 : index
    %142 = vector.load %arg2[%c4_81, %c0_82, %c0_83] : memref<5x32x32xf32, #tpu.memory_space<vmem>>, vector<1x32x32xf32>
    %143 = vector.shape_cast %142 : vector<1x32x32xf32> to vector<32x32xf32>
    %cst_84 = arith.constant dense<0.000000e+00> : vector<64x32xf32>
    %144 = tpu.matmul %141, %143, %cst_84 {dimension_numbers = #tpu.dot_dimension_numbers<[1], [0], [0], [1], [0, 0, 1, 1], [], []>} : vector<64x32xf32>, vector<32x32xf32>, vector<64x32xf32> -> vector<64x32xf32>
    %c1_85 = arith.constant 1 : index
    %c0_86 = arith.constant 0 : index
    %c0_87 = arith.constant 0 : index
    %145 = vector.load %arg1[%c1_85, %c0_86, %c0_87] : memref<6x64x64xf32, #tpu.memory_space<vmem>>, vector<1x64x64xf32>
    %146 = vector.shape_cast %145 : vector<1x64x64xf32> to vector<64x64xf32>
    %cst_88 = arith.constant dense<0.000000e+00> : vector<64x32xf32>
    %147 = tpu.matmul %146, %144, %cst_88 {dimension_numbers = #tpu.dot_dimension_numbers<[1], [0], [0], [1], [0, 0, 1, 1], [], []>} : vector<64x64xf32>, vector<64x32xf32>, vector<64x32xf32> -> vector<64x32xf32>
    %c6 = arith.constant 6 : index
    %c0_89 = arith.constant 0 : index
    %148 = vector.load %arg6[%c6, %c0_89] : memref<8x64xf32, #tpu.memory_space<vmem>>, vector<1x32xf32>
    %149 = vector.broadcast %148 : vector<1x32xf32> to vector<64x32xf32>
    %150 = arith.addf %147, %149 : vector<64x32xf32>
    %c0_90 = arith.constant 0 : index
    %c0_91 = arith.constant 0 : index
    %151 = vector.load %arg8[%c0_90, %c0_91] : memref<64x32xf32, #tpu.memory_space<vmem>>, vector<64x32xf32>
    tpu.vector_store %arg8[%c0_90, %c0_91], %150 {strides = array<i32>} : memref<64x32xf32, #tpu.memory_space<vmem>>, vector<64x32xf32>,
    return
  }
}

</mosaic_0001>

<llo_original>
// kernel: encoder_forward.1
$region0: #{encoder_forward.1}
  #allocation0 [shape = 'u32[]', space=smem, size = 0x4, offset = 0x4, fixed_abs, tag = 'smem constant byte address 0x4 - core index']
  #allocation1 [shape = 'u32[144,128]{1,0:T(1,128)}', space=vmem, size = 0x12000, scoped, tag = 'internal scratch']
  %s0 = inlined_call_operand.vmem [shape: f32[64,32], index: 0, kind: input, shape index: {}]
  %s1 = inlined_call_operand.hbm [shape: f32[6,64,64], index: 1, kind: input, shape index: {}]
  %s2 = inlined_call_operand.hbm [shape: f32[5,32,32], index: 2, kind: input, shape index: {}]
  %s3 = inlined_call_operand.vmem [shape: f32[32,64], index: 3, kind: input, shape index: {}]
  %s4 = inlined_call_operand.vmem [shape: f32[64,32], index: 4, kind: input, shape index: {}]
  %s5 = inlined_call_operand.hbm [shape: f32[32,64], index: 5, kind: input, shape index: {}]
  %s6 = inlined_call_operand.vmem [shape: f32[8,64], index: 6, kind: input, shape index: {}]
  %s7 = inlined_call_operand.vmem [shape: f32[32,8], index: 7, kind: input, shape index: {}]
  %s8 = inlined_call_operand.hbm [shape: f32[64,32], index: 8, kind: output, shape index: {}]
  %s9 = sld [smem:[#allocation0]]
  $region54: #{encoder_forward.1} parent=0
    _
  %s11 = ssub.s32 1, %s9
  %s12 = scalar_select 0, %s11, %s9
  $region1: #{encoder_forward.1} parent=0
    #allocation2 [shape = 'u8[196608]{0}', space=vmem, size = 0x30000, scoped, tag = 'input window, operand 1, single buffered']
    #allocation3 [shape = 's32[1]{0}', space=sflag, size = 0x4, scoped, tag = 'scoped memory for encoder_forward.1']
    #allocation4 [shape = 's32[1]{0}', space=sflag, size = 0x4, scoped, tag = 'scoped memory for encoder_forward.1']
    #allocation5 [shape = 'u8[81920]{0}', space=vmem, size = 0x14000, scoped, tag = 'input window, operand 2, single buffered']
    #allocation6 [shape = 's32[1]{0}', space=sflag, size = 0x4, scoped, tag = 'scoped memory for encoder_forward.1']
    #allocation7 [shape = 'u8[16384]{0}', space=vmem, size = 0x4000, scoped, tag = 'input window, operand 5, single buffered']
    #allocation8 [shape = 'u8[32768]{0}', space=vmem, size = 0x8000, scoped, tag = 'output window, operand 0, single buffered']
    %13 = vsyncpa [#allocation3], 0
    %14 = vsyncpa [#allocation6], 0
    %15 = vsyncpa [#allocation4], 0
    // Predicated region
    $region2: #{encoder_forward.1} parent=1 // pred_check
      _
    $region3: #{encoder_forward.1} parent=1 // pred_check_branch
      %17 = sbr.rel (0) target = $region5
    $region4: #{encoder_forward.1} parent=1 // pred_region
      _
    $region5: #{encoder_forward.1} parent=1 // pred_fallthru
      _
    // Predicated region
    $region6: #{encoder_forward.1} parent=1 // pred_check
      _
    $region7: #{encoder_forward.1} parent=1 // pred_check_branch
      %19 = sbr.rel (0) target = $region9
    $region8: #{encoder_forward.1} parent=1 // pred_region
      %s21 = ssub.s32 6144, 6144
      %22 = vsyncadd [#allocation3], %s21
      %s23 = sshll.u32 [#allocation2], 4
      %s24 = int_to_ptr.vmem [resolvable:$true] %s23
      %29 = dma.hbm_to_vmem [thread:$0]  %s1, 6144, %s24, [#allocation3], 128, 128, 8
    $region9: #{encoder_forward.1} parent=1 // pred_fallthru
      _
    // Predicated region
    $region10: #{encoder_forward.1} parent=1 // pred_check
      _
    $region11: #{encoder_forward.1} parent=1 // pred_check_branch
      %31 = sbr.rel (0) target = $region13
    $region12: #{encoder_forward.1} parent=1 // pred_region
      %s33 = ssub.s32 2560, 2560
      %34 = vsyncadd [#allocation6], %s33
      %s35 = sshll.u32 [#allocation5], 4
      %s36 = int_to_ptr.vmem [resolvable:$true] %s35
      %41 = dma.hbm_to_vmem [thread:$0]  %s2, 2560, %s36, [#allocation6], 128, 128, 8
    $region13: #{encoder_forward.1} parent=1 // pred_fallthru
      _
    // Predicated region
    $region14: #{encoder_forward.1} parent=1 // pred_check
      _
    $region15: #{encoder_forward.1} parent=1 // pred_check_branch
      %43 = sbr.rel (0) target = $region17
    $region16: #{encoder_forward.1} parent=1 // pred_region
      _
    $region17: #{encoder_forward.1} parent=1 // pred_fallthru
      _
    // Predicated region
    $region18: #{encoder_forward.1} parent=1 // pred_check
      _
    $region19: #{encoder_forward.1} parent=1 // pred_check_branch
      %45 = sbr.rel (0) target = $region21
    $region20: #{encoder_forward.1} parent=1 // pred_region
      _
    $region21: #{encoder_forward.1} parent=1 // pred_fallthru
      _
    // Predicated region
    $region22: #{encoder_forward.1} parent=1 // pred_check
      _
    $region23: #{encoder_forward.1} parent=1 // pred_check_branch
      %47 = sbr.rel (0) target = $region25
    $region24: #{encoder_forward.1} parent=1 // pred_region
      %s49 = ssub.s32 512, 512
      %50 = vsyncadd [#allocation6], %s49
      %s51 = sshll.u32 [#allocation7], 4
      %s52 = int_to_ptr.vmem [resolvable:$true] %s51
      %57 = dma.hbm_to_vmem [thread:$0]  %s5, 512, %s52, [#allocation6], 128, 128, 8
    $region25: #{encoder_forward.1} parent=1 // pred_fallthru
      _
    // Predicated region
    $region26: #{encoder_forward.1} parent=1 // pred_check
      _
    $region27: #{encoder_forward.1} parent=1 // pred_check_branch
      %59 = sbr.rel (0) target = $region29
    $region28: #{encoder_forward.1} parent=1 // pred_region
      _
    $region29: #{encoder_forward.1} parent=1 // pred_fallthru
      _
    // Predicated region
    $region30: #{encoder_forward.1} parent=1 // pred_check
      _
    $region31: #{encoder_forward.1} parent=1 // pred_check_branch
      %61 = sbr.rel (0) target = $region33
    $region32: #{encoder_forward.1} parent=1 // pred_region
      _
    $region33: #{encoder_forward.1} parent=1 // pred_fallthru
      _
    // Predicated region
    $region34: #{encoder_forward.1} parent=1 // pred_check
      _
    $region35: #{encoder_forward.1} parent=1 // pred_check_branch
      %63 = sbr.rel (0) target = $region37
    $region36: #{encoder_forward.1} parent=1 // pred_region
      %64 = dma.done [#allocation3], 6144
    $region37: #{encoder_forward.1} parent=1 // pred_fallthru
      _
    // Predicated region
    $region38: #{encoder_forward.1} parent=1 // pred_check
      _
    $region39: #{encoder_forward.1} parent=1 // pred_check_branch
      %66 = sbr.rel (0) target = $region41
    $region40: #{encoder_forward.1} parent=1 // pred_region
      %67 = dma.done [#allocation6], 2560
    $region41: #{encoder_forward.1} parent=1 // pred_fallthru
      _
    // Predicated region
    $region42: #{encoder_forward.1} parent=1 // pred_check
      _
    $region43: #{encoder_forward.1} parent=1 // pred_check_branch
      %69 = sbr.rel (0) target = $region45
    $region44: #{encoder_forward.1} parent=1 // pred_region
      %70 = dma.done [#allocation6], 512
    $region45: #{encoder_forward.1} parent=1 // pred_fallthru
      _
    %v71 = vld [vmem:[#allocation2] sm:$0xff]
    %v72 = vld [vmem:[#allocation2 + $0x8] sm:$0xff]
    %v73 = vld [vmem:[#allocation2 + $0x10] sm:$0xff]
    %v74 = vld [vmem:[#allocation2 + $0x18] sm:$0xff]
    %v75 = vld [vmem:[#allocation2 + $0x20] sm:$0xff]
    %v76 = vld [vmem:[#allocation2 + $0x28] sm:$0xff]
    %v77 = vld [vmem:[#allocation2 + $0x30] sm:$0xff]
    %v78 = vld [vmem:[#allocation2 + $0x38] sm:$0xff]
    %v79 = vld [vmem:[%s0] sm:$0xff]
    %v80 = vld [vmem:[%s0 + $0x8] sm:$0xff]
    %v81 = vld [vmem:[%s0 + $0x10] sm:$0xff]
    %v82 = vld [vmem:[%s0 + $0x18] sm:$0xff]
    %v83 = vld [vmem:[%s0 + $0x20] sm:$0xff]
    %v84 = vld [vmem:[%s0 + $0x28] sm:$0xff]
    %v85 = vld [vmem:[%s0 + $0x30] sm:$0xff]
    %v86 = vld [vmem:[%s0 + $0x38] sm:$0xff]
    %vm87 = vcmask 523264
    %v89 = vsel %vm87, %v71, 0
    %v92 = vsel %vm87, %v72, 0
    %v95 = vsel %vm87, %v73, 0
    %v98 = vsel %vm87, %v74, 0
    %v101 = vsel %vm87, %v75, 0
    %v104 = vsel %vm87, %v76, 0
    %v107 = vsel %vm87, %v77, 0
    %v110 = vsel %vm87, %v78, 0
    %112 = vmatprep.subr.mxu0 0.0
    %113 = vmatpush1.msra.mxu0 0.0
    %114 = vmatprep.subr.mxu0 0.0
    %115 = vmatpush1.msra.mxu0 0.0
    %116 = vmatprep.subr.mxu0 0.0
    %117 = vmatpush1.msra.mxu0 0.0
    %118 = vmatprep.subr.mxu0 0.0
    %119 = vmatpush1.msra.mxu0 0.0
    %120 = vmatprep.subr.mxu0 0.0
    %121 = vmatpush1.msra.mxu0 0.0
    %122 = vmatprep.subr.mxu0 0.0
    %123 = vmatpush1.msra.mxu0 0.0
    %124 = vmatprep.subr.mxu0 0.0
    %125 = vmatpush1.msra.mxu0 0.0
    %126 = vmatprep.subr.mxu0 0.0
    %127 = vmatpush1.msra.mxu0 0.0
    %128 = vmatprep.subr.mxu0 0.0
    %129 = vmatpush1.msra.mxu0 %v86
    %130 = vmatprep.subr.mxu0 0.0
    %131 = vmatpush1.msra.mxu0 %v85
    %132 = vmatprep.subr.mxu0 0.0
    %133 = vmatpush1.msra.mxu0 %v84
    %134 = vmatprep.subr.mxu0 0.0
    %135 = vmatpush1.msra.mxu0 %v83
    %136 = vmatprep.subr.mxu0 0.0
    %137 = vmatpush1.msra.mxu0 %v82
    %138 = vmatprep.subr.mxu0 0.0
    %139 = vmatpush1.msra.mxu0 %v81
    %140 = vmatprep.subr.mxu0 0.0
    %141 = vmatpush1.msra.mxu0 %v80
    %142 = vmatprep.subr.mxu0 0.0
    %143 = vmatpush1.msra.mxu0 %v79
    %144 = vmatprep.subr.mxu0 0.0
    %145 = vmatpush2.msra.mxu0 0.0
    %146 = vmatprep.subr.mxu0 0.0
    %147 = vmatpush2.msra.mxu0 0.0
    %148 = vmatprep.subr.mxu0 0.0
    %149 = vmatpush2.msra.mxu0 0.0
    %150 = vmatprep.subr.mxu0 0.0
    %151 = vmatpush2.msra.mxu0 0.0
    %152 = vmatprep.subr.mxu0 0.0
    %153 = vmatpush2.msra.mxu0 0.0
    %154 = vmatprep.subr.mxu0 0.0
    %155 = vmatpush2.msra.mxu0 0.0
    %156 = vmatprep.subr.mxu0 0.0
    %157 = vmatpush2.msra.mxu0 0.0
    %158 = vmatprep.subr.mxu0 0.0
    %159 = vmatpush2.msra.mxu0 0.0
    %160 = vmatprep.subr.mxu0 0.0
    %161 = vmatpush2.msra.mxu0 0.0
    %162 = vmatprep.subr.mxu0 0.0
    %163 = vmatpush2.msra.mxu0 0.0
    %164 = vmatprep.subr.mxu0 0.0
    %165 = vmatpush2.msra.mxu0 0.0
    %166 = vmatprep.subr.mxu0 0.0
    %167 = vmatpush2.msra.mxu0 0.0
    %168 = vmatprep.subr.mxu0 0.0
    %169 = vmatpush2.msra.mxu0 0.0
    %170 = vmatprep.subr.mxu0 0.0
    %171 = vmatpush2.msra.mxu0 0.0
    %172 = vmatprep.subr.mxu0 0.0
    %173 = vmatpush2.msra.mxu0 0.0
    %174 = vmatprep.subr.mxu0 0.0
    %175 = vmatpush2.msra.mxu0 0.0
    %176 = vmatprep.mubr.f32.mxu0 0.0
    %177 = vmatmul.mubr.f32.gmra.mxu0 %v89
    %v178 = vpop.f32.mrf.mxu0
    %v179 = vadd.f32 0.0, %v178
    %v180 = vpop.f32.mrf.mxu0
    %181 = vmatprep.mubr.f32.mxu0 0.0
    %182 = vmatmul.mubr.f32.gmra.mxu0 %v92
    %v183 = vpop.f32.mrf.mxu0
    %v184 = vadd.f32 0.0, %v183
    %v185 = vpop.f32.mrf.mxu0
    %186 = vmatprep.mubr.f32.mxu0 0.0
    %187 = vmatmul.mubr.f32.gmra.mxu0 %v95
    %v188 = vpop.f32.mrf.mxu0
    %v189 = vadd.f32 0.0, %v188
    %v190 = vpop.f32.mrf.mxu0
    %191 = vmatprep.mubr.f32.mxu0 0.0
    %192 = vmatmul.mubr.f32.gmra.mxu0 %v98
    %v193 = vpop.f32.mrf.mxu0
    %v194 = vadd.f32 0.0, %v193
    %v195 = vpop.f32.mrf.mxu0
    %196 = vmatprep.mubr.f32.mxu0 0.0
    %197 = vmatmul.mubr.f32.gmra.mxu0 %v101
    %v198 = vpop.f32.mrf.mxu0
    %v199 = vadd.f32 0.0, %v198
    %v200 = vpop.f32.mrf.mxu0
    %201 = vmatprep.mubr.f32.mxu0 0.0
    %202 = vmatmul.mubr.f32.gmra.mxu0 %v104
    %v203 = vpop.f32.mrf.mxu0
    %v204 = vadd.f32 0.0, %v203
    %v205 = vpop.f32.mrf.mxu0
    %206 = vmatprep.mubr.f32.mxu0 0.0
    %207 = vmatmul.mubr.f32.gmra.mxu0 %v107
    %v208 = vpop.f32.mrf.mxu0
    %v209 = vadd.f32 0.0, %v208
    %v210 = vpop.f32.mrf.mxu0
    %211 = vmatprep.mubr.f32.mxu0 0.0
    %212 = vmatmul.mubr.f32.gmra.mxu0 %v110
    %v213 = vpop.f32.mrf.mxu0
    %v214 = vadd.f32 0.0, %v213
    %v215 = vpop.f32.mrf.mxu0
    %216 = vdwg.mxu0
    %v217 = vld [vmem:[#allocation5] sm:$0xff]
    %v218 = vld [vmem:[#allocation5 + $0x8] sm:$0xff]
    %v219 = vld [vmem:[#allocation5 + $0x10] sm:$0xff]
    %v220 = vld [vmem:[#allocation5 + $0x18] sm:$0xff]
    %v221 = vld [vmem:[%s6] sm:$0x1]
    %v222 = vlaneseq
    %v223 = vshrl.u32 %v222, 7
    %v224 = vsub.s32 0, %v223
    %v225 = vrot.slane %v221, %v224
    %vm226 = vcmask 261120
    %v228 = vsel %vm226, %v179, 0
    %v231 = vsel %vm226, %v184, 0
    %v234 = vsel %vm226, %v189, 0
    %v237 = vsel %vm226, %v194, 0
    %v240 = vsel %vm226, %v199, 0
    %v243 = vsel %vm226, %v204, 0
    %v246 = vsel %vm226, %v209, 0
    %v249 = vsel %vm226, %v214, 0
    %251 = vmatprep.subr.mxu0 0.0
    %252 = vmatpush1.msra.mxu0 0.0
    %253 = vmatprep.subr.mxu0 0.0
    %254 = vmatpush1.msra.mxu0 0.0
    %255 = vmatprep.subr.mxu0 0.0
    %256 = vmatpush1.msra.mxu0 0.0
    %257 = vmatprep.subr.mxu0 0.0
    %258 = vmatpush1.msra.mxu0 0.0
    %259 = vmatprep.subr.mxu0 0.0
    %260 = vmatpush1.msra.mxu0 0.0
    %261 = vmatprep.subr.mxu0 0.0
    %262 = vmatpush1.msra.mxu0 0.0
    %263 = vmatprep.subr.mxu0 0.0
    %264 = vmatpush1.msra.mxu0 0.0
    %265 = vmatprep.subr.mxu0 0.0
    %266 = vmatpush1.msra.mxu0 0.0
    %267 = vmatprep.subr.mxu0 0.0
    %268 = vmatpush1.msra.mxu0 0.0
    %269 = vmatprep.subr.mxu0 0.0
    %270 = vmatpush1.msra.mxu0 0.0
    %271 = vmatprep.subr.mxu0 0.0
    %272 = vmatpush1.msra.mxu0 0.0
    %273 = vmatprep.subr.mxu0 0.0
    %274 = vmatpush1.msra.mxu0 0.0
    %275 = vmatprep.subr.mxu0 0.0
    %276 = vmatpush1.msra.mxu0 %v220
    %277 = vmatprep.subr.mxu0 0.0
    %278 = vmatpush1.msra.mxu0 %v219
    %279 = vmatprep.subr.mxu0 0.0
    %280 = vmatpush1.msra.mxu0 %v218
    %281 = vmatprep.subr.mxu0 0.0
    %282 = vmatpush1.msra.mxu0 %v217
    %283 = vmatprep.subr.mxu0 0.0
    %284 = vmatpush2.msra.mxu0 0.0
    %285 = vmatprep.subr.mxu0 0.0
    %286 = vmatpush2.msra.mxu0 0.0
    %287 = vmatprep.subr.mxu0 0.0
    %288 = vmatpush2.msra.mxu0 0.0
    %289 = vmatprep.subr.mxu0 0.0
    %290 = vmatpush2.msra.mxu0 0.0
    %291 = vmatprep.subr.mxu0 0.0
    %292 = vmatpush2.msra.mxu0 0.0
    %293 = vmatprep.subr.mxu0 0.0
    %294 = vmatpush2.msra.mxu0 0.0
    %295 = vmatprep.subr.mxu0 0.0
    %296 = vmatpush2.msra.mxu0 0.0
    %297 = vmatprep.subr.mxu0 0.0
    %298 = vmatpush2.msra.mxu0 0.0
    %299 = vmatprep.subr.mxu0 0.0
    %300 = vmatpush2.msra.mxu0 0.0
    %301 = vmatprep.subr.mxu0 0.0
    %302 = vmatpush2.msra.mxu0 0.0
    %303 = vmatprep.subr.mxu0 0.0
    %304 = vmatpush2.msra.mxu0 0.0
    %305 = vmatprep.subr.mxu0 0.0
    %306 = vmatpush2.msra.mxu0 0.0
    %307 = vmatprep.subr.mxu0 0.0
    %308 = vmatpush2.msra.mxu0 0.0
    %309 = vmatprep.subr.mxu0 0.0
    %310 = vmatpush2.msra.mxu0 0.0
    %311 = vmatprep.subr.mxu0 0.0
    %312 = vmatpush2.msra.mxu0 0.0
    %313 = vmatprep.subr.mxu0 0.0
    %314 = vmatpush2.msra.mxu0 0.0
    %315 = vmatprep.mubr.f32.mxu0 0.0
    %316 = vmatmul.mubr.f32.gmra.mxu0 %v228
    %v317 = vpop.f32.mrf.mxu0
    %v318 = vadd.f32 %v225, %v317
    %v319 = vpop.f32.mrf.mxu0
    %320 = vmatprep.mubr.f32.mxu0 0.0
    %321 = vmatmul.mubr.f32.gmra.mxu0 %v231
    %v322 = vpop.f32.mrf.mxu0
    %v323 = vadd.f32 %v225, %v322
    %v324 = vpop.f32.mrf.mxu0
    %325 = vmatprep.mubr.f32.mxu0 0.0
    %326 = vmatmul.mubr.f32.gmra.mxu0 %v234
    %v327 = vpop.f32.mrf.mxu0
    %v328 = vadd.f32 %v225, %v327
    %v329 = vpop.f32.mrf.mxu0
    %330 = vmatprep.mubr.f32.mxu0 0.0
    %331 = vmatmul.mubr.f32.gmra.mxu0 %v237
    %v332 = vpop.f32.mrf.mxu0
    %v333 = vadd.f32 %v225, %v332
    %v334 = vpop.f32.mrf.mxu0
    %335 = vmatprep.mubr.f32.mxu0 0.0
    %336 = vmatmul.mubr.f32.gmra.mxu0 %v240
    %v337 = vpop.f32.mrf.mxu0
    %v338 = vadd.f32 %v225, %v337
    %v339 = vpop.f32.mrf.mxu0
    %340 = vmatprep.mubr.f32.mxu0 0.0
    %341 = vmatmul.mubr.f32.gmra.mxu0 %v243
    %v342 = vpop.f32.mrf.mxu0
    %v343 = vadd.f32 %v225, %v342
    %v344 = vpop.f32.mrf.mxu0
    %345 = vmatprep.mubr.f32.mxu0 0.0
    %346 = vmatmul.mubr.f32.gmra.mxu0 %v246
    %v347 = vpop.f32.mrf.mxu0
    %v348 = vadd.f32 %v225, %v347
    %v349 = vpop.f32.mrf.mxu0
    %350 = vmatprep.mubr.f32.mxu0 0.0
    %351 = vmatmul.mubr.f32.gmra.mxu0 %v249
    %v352 = vpop.f32.mrf.mxu0
    %v353 = vadd.f32 %v225, %v352
    %v354 = vpop.f32.mrf.mxu0
    %355 = vdwg.mxu0
    %s356 = scalar_lea.vmem [#allocation5], 32
    %v357 = vld [vmem:[%s356] sm:$0xff]
    %v358 = vld [vmem:[%s356 + $0x8] sm:$0xff]
    %v359 = vld [vmem:[%s356 + $0x10] sm:$0xff]
    %v360 = vld [vmem:[%s356 + $0x18] sm:$0xff]
    %v361 = vld [vmem:[%s6 + $0x1] sm:$0x1]
    %v362 = vlaneseq
    %v363 = vshrl.u32 %v362, 7
    %v364 = vsub.s32 0, %v363
    %v365 = vrot.slane %v361, %v364
    %366 = vmatprep.subr.mxu0 0.0
    %367 = vmatpush1.msra.mxu0 0.0
    %368 = vmatprep.subr.mxu0 0.0
    %369 = vmatpush1.msra.mxu0 0.0
    %370 = vmatprep.subr.mxu0 0.0
    %371 = vmatpush1.msra.mxu0 0.0
    %372 = vmatprep.subr.mxu0 0.0
    %373 = vmatpush1.msra.mxu0 0.0
    %374 = vmatprep.subr.mxu0 0.0
    %375 = vmatpush1.msra.mxu0 0.0
    %376 = vmatprep.subr.mxu0 0.0
    %377 = vmatpush1.msra.mxu0 0.0
    %378 = vmatprep.subr.mxu0 0.0
    %379 = vmatpush1.msra.mxu0 0.0
    %380 = vmatprep.subr.mxu0 0.0
    %381 = vmatpush1.msra.mxu0 0.0
    %382 = vmatprep.subr.mxu0 0.0
    %383 = vmatpush1.msra.mxu0 0.0
    %384 = vmatprep.subr.mxu0 0.0
    %385 = vmatpush1.msra.mxu0 0.0
    %386 = vmatprep.subr.mxu0 0.0
    %387 = vmatpush1.msra.mxu0 0.0
    %388 = vmatprep.subr.mxu0 0.0
    %389 = vmatpush1.msra.mxu0 0.0
    %390 = vmatprep.subr.mxu0 0.0
    %391 = vmatpush1.msra.mxu0 %v360
    %392 = vmatprep.subr.mxu0 0.0
    %393 = vmatpush1.msra.mxu0 %v359
    %394 = vmatprep.subr.mxu0 0.0
    %395 = vmatpush1.msra.mxu0 %v358
    %396 = vmatprep.subr.mxu0 0.0
    %397 = vmatpush1.msra.mxu0 %v357
    %398 = vmatprep.subr.mxu0 0.0
    %399 = vmatpush2.msra.mxu0 0.0
    %400 = vmatprep.subr.mxu0 0.0
    %401 = vmatpush2.msra.mxu0 0.0
    %402 = vmatprep.subr.mxu0 0.0
    %403 = vmatpush2.msra.mxu0 0.0
    %404 = vmatprep.subr.mxu0 0.0
    %405 = vmatpush2.msra.mxu0 0.0
    %406 = vmatprep.subr.mxu0 0.0
    %407 = vmatpush2.msra.mxu0 0.0
    %408 = vmatprep.subr.mxu0 0.0
    %409 = vmatpush2.msra.mxu0 0.0
    %410 = vmatprep.subr.mxu0 0.0
    %411 = vmatpush2.msra.mxu0 0.0
    %412 = vmatprep.subr.mxu0 0.0
    %413 = vmatpush2.msra.mxu0 0.0
    %414 = vmatprep.subr.mxu0 0.0
    %415 = vmatpush2.msra.mxu0 0.0
    %416 = vmatprep.subr.mxu0 0.0
    %417 = vmatpush2.msra.mxu0 0.0
    %418 = vmatprep.subr.mxu0 0.0
    %419 = vmatpush2.msra.mxu0 0.0
    %420 = vmatprep.subr.mxu0 0.0
    %421 = vmatpush2.msra.mxu0 0.0
    %422 = vmatprep.subr.mxu0 0.0
    %423 = vmatpush2.msra.mxu0 0.0
    %424 = vmatprep.subr.mxu0 0.0
    %425 = vmatpush2.msra.mxu0 0.0
    %426 = vmatprep.subr.mxu0 0.0
    %427 = vmatpush2.msra.mxu0 0.0
    %428 = vmatprep.subr.mxu0 0.0
    %429 = vmatpush2.msra.mxu0 0.0
    %430 = vmatprep.mubr.f32.mxu0 0.0
    %431 = vmatmul.mubr.f32.gmra.mxu0 %v228
    %v432 = vpop.f32.mrf.mxu0
    %v433 = vadd.f32 %v365, %v432
    %v434 = vpop.f32.mrf.mxu0
    %435 = vmatprep.mubr.f32.mxu0 0.0
    %436 = vmatmul.mubr.f32.gmra.mxu0 %v231
    %v437 = vpop.f32.mrf.mxu0
    %v438 = vadd.f32 %v365, %v437
    %v439 = vpop.f32.mrf.mxu0
    %440 = vmatprep.mubr.f32.mxu0 0.0
    %441 = vmatmul.mubr.f32.gmra.mxu0 %v234
    %v442 = vpop.f32.mrf.mxu0
    %v443 = vadd.f32 %v365, %v442
    %v444 = vpop.f32.mrf.mxu0
    %445 = vmatprep.mubr.f32.mxu0 0.0
    %446 = vmatmul.mubr.f32.gmra.mxu0 %v237
    %v447 = vpop.f32.mrf.mxu0
    %v448 = vadd.f32 %v365, %v447
    %v449 = vpop.f32.mrf.mxu0
    %450 = vmatprep.mubr.f32.mxu0 0.0
    %451 = vmatmul.mubr.f32.gmra.mxu0 %v240
    %v452 = vpop.f32.mrf.mxu0
    %v453 = vadd.f32 %v365, %v452
    %v454 = vpop.f32.mrf.mxu0
    %455 = vmatprep.mubr.f32.mxu0 0.0
    %456 = vmatmul.mubr.f32.gmra.mxu0 %v243
    %v457 = vpop.f32.mrf.mxu0
    %v458 = vadd.f32 %v365, %v457
    %v459 = vpop.f32.mrf.mxu0
    %460 = vmatprep.mubr.f32.mxu0 0.0
    %461 = vmatmul.mubr.f32.gmra.mxu0 %v246
    %v462 = vpop.f32.mrf.mxu0
    %v463 = vadd.f32 %v365, %v462
    %v464 = vpop.f32.mrf.mxu0
    %465 = vmatprep.mubr.f32.mxu0 0.0
    %466 = vmatmul.mubr.f32.gmra.mxu0 %v249
    %v467 = vpop.f32.mrf.mxu0
    %v468 = vadd.f32 %v365, %v467
    %v469 = vpop.f32.mrf.mxu0
    %470 = vdwg.mxu0
    %s471 = scalar_lea.vmem [#allocation5], 64
    %v472 = vld [vmem:[%s471] sm:$0xff]
    %v473 = vld [vmem:[%s471 + $0x8] sm:$0xff]
    %v474 = vld [vmem:[%s471 + $0x10] sm:$0xff]
    %v475 = vld [vmem:[%s471 + $0x18] sm:$0xff]
    %v476 = vld [vmem:[%s6 + $0x2] sm:$0x1]
    %v477 = vlaneseq
    %v478 = vshrl.u32 %v477, 7
    %v479 = vsub.s32 0, %v478
    %v480 = vrot.slane %v476, %v479
    %481 = vmatprep.subr.mxu0 0.0
    %482 = vmatpush1.msra.mxu0 0.0
    %483 = vmatprep.subr.mxu0 0.0
    %484 = vmatpush1.msra.mxu0 0.0
    %485 = vmatprep.subr.mxu0 0.0
    %486 = vmatpush1.msra.mxu0 0.0
    %487 = vmatprep.subr.mxu0 0.0
    %488 = vmatpush1.msra.mxu0 0.0
    %489 = vmatprep.subr.mxu0 0.0
    %490 = vmatpush1.msra.mxu0 0.0
    %491 = vmatprep.subr.mxu0 0.0
    %492 = vmatpush1.msra.mxu0 0.0
    %493 = vmatprep.subr.mxu0 0.0
    %494 = vmatpush1.msra.mxu0 0.0
    %495 = vmatprep.subr.mxu0 0.0
    %496 = vmatpush1.msra.mxu0 0.0
    %497 = vmatprep.subr.mxu0 0.0
    %498 = vmatpush1.msra.mxu0 0.0
    %499 = vmatprep.subr.mxu0 0.0
    %500 = vmatpush1.msra.mxu0 0.0
    %501 = vmatprep.subr.mxu0 0.0
    %502 = vmatpush1.msra.mxu0 0.0
    %503 = vmatprep.subr.mxu0 0.0
    %504 = vmatpush1.msra.mxu0 0.0
    %505 = vmatprep.subr.mxu0 0.0
    %506 = vmatpush1.msra.mxu0 %v475
    %507 = vmatprep.subr.mxu0 0.0
    %508 = vmatpush1.msra.mxu0 %v474
    %509 = vmatprep.subr.mxu0 0.0
    %510 = vmatpush1.msra.mxu0 %v473
    %511 = vmatprep.subr.mxu0 0.0
    %512 = vmatpush1.msra.mxu0 %v472
    %513 = vmatprep.subr.mxu0 0.0
    %514 = vmatpush2.msra.mxu0 0.0
    %515 = vmatprep.subr.mxu0 0.0
    %516 = vmatpush2.msra.mxu0 0.0
    %517 = vmatprep.subr.mxu0 0.0
    %518 = vmatpush2.msra.mxu0 0.0
    %519 = vmatprep.subr.mxu0 0.0
    %520 = vmatpush2.msra.mxu0 0.0
    %521 = vmatprep.subr.mxu0 0.0
    %522 = vmatpush2.msra.mxu0 0.0
    %523 = vmatprep.subr.mxu0 0.0
    %524 = vmatpush2.msra.mxu0 0.0
    %525 = vmatprep.subr.mxu0 0.0
    %526 = vmatpush2.msra.mxu0 0.0
    %527 = vmatprep.subr.mxu0 0.0
    %528 = vmatpush2.msra.mxu0 0.0
    %529 = vmatprep.subr.mxu0 0.0
    %530 = vmatpush2.msra.mxu0 0.0
    %531 = vmatprep.subr.mxu0 0.0
    %532 = vmatpush2.msra.mxu0 0.0
    %533 = vmatprep.subr.mxu0 0.0
    %534 = vmatpush2.msra.mxu0 0.0
    %535 = vmatprep.subr.mxu0 0.0
    %536 = vmatpush2.msra.mxu0 0.0
    %537 = vmatprep.subr.mxu0 0.0
    %538 = vmatpush2.msra.mxu0 0.0
    %539 = vmatprep.subr.mxu0 0.0
    %540 = vmatpush2.msra.mxu0 0.0
    %541 = vmatprep.subr.mxu0 0.0
    %542 = vmatpush2.msra.mxu0 0.0
    %543 = vmatprep.subr.mxu0 0.0
    %544 = vmatpush2.msra.mxu0 0.0
    %545 = vmatprep.mubr.f32.mxu0 0.0
    %546 = vmatmul.mubr.f32.gmra.mxu0 %v228
    %v547 = vpop.f32.mrf.mxu0
    %v548 = vadd.f32 %v480, %v547
    %v549 = vpop.f32.mrf.mxu0
    %550 = vmatprep.mubr.f32.mxu0 0.0
    %551 = vmatmul.mubr.f32.gmra.mxu0 %v231
    %v552 = vpop.f32.mrf.mxu0
    %v553 = vadd.f32 %v480, %v552
    %v554 = vpop.f32.mrf.mxu0
    %555 = vmatprep.mubr.f32.mxu0 0.0
    %556 = vmatmul.mubr.f32.gmra.mxu0 %v234
    %v557 = vpop.f32.mrf.mxu0
    %v558 = vadd.f32 %v480, %v557
    %v559 = vpop.f32.mrf.mxu0
    %560 = vmatprep.mubr.f32.mxu0 0.0
    %561 = vmatmul.mubr.f32.gmra.mxu0 %v237
    %v562 = vpop.f32.mrf.mxu0
    %v563 = vadd.f32 %v480, %v562
    %v564 = vpop.f32.mrf.mxu0
    %565 = vmatprep.mubr.f32.mxu0 0.0
    %566 = vmatmul.mubr.f32.gmra.mxu0 %v240
    %v567 = vpop.f32.mrf.mxu0
    %v568 = vadd.f32 %v480, %v567
    %v569 = vpop.f32.mrf.mxu0
    %570 = vmatprep.mubr.f32.mxu0 0.0
    %571 = vmatmul.mubr.f32.gmra.mxu0 %v243
    %v572 = vpop.f32.mrf.mxu0
    %v573 = vadd.f32 %v480, %v572
    %v574 = vpop.f32.mrf.mxu0
    %575 = vmatprep.mubr.f32.mxu0 0.0
    %576 = vmatmul.mubr.f32.gmra.mxu0 %v246
    %v577 = vpop.f32.mrf.mxu0
    %v578 = vadd.f32 %v480, %v577
    %v579 = vpop.f32.mrf.mxu0
    %580 = vmatprep.mubr.f32.mxu0 0.0
    %581 = vmatmul.mubr.f32.gmra.mxu0 %v249
    %v582 = vpop.f32.mrf.mxu0
    %v583 = vadd.f32 %v480, %v582
    %v584 = vpop.f32.mrf.mxu0
    %585 = vdwg.mxu0
    %s586 = scalar_lea.vmem [#allocation2], 128
    %v587 = vld [vmem:[%s586] sm:$0xff]
    %v588 = vld [vmem:[%s586 + $0x8] sm:$0xff]
    %v589 = vld [vmem:[%s586 + $0x10] sm:$0xff]
    %v590 = vld [vmem:[%s586 + $0x18] sm:$0xff]
    %v591 = vld [vmem:[%s586 + $0x20] sm:$0xff]
    %v592 = vld [vmem:[%s586 + $0x28] sm:$0xff]
    %v593 = vld [vmem:[%s586 + $0x30] sm:$0xff]
    %v594 = vld [vmem:[%s586 + $0x38] sm:$0xff]
    %v596 = vsel %vm226, %v318, 0
    %v599 = vsel %vm226, %v323, 0
    %v602 = vsel %vm226, %v328, 0
    %v605 = vsel %vm226, %v333, 0
    %v608 = vsel %vm226, %v338, 0
    %v611 = vsel %vm226, %v343, 0
    %v614 = vsel %vm226, %v348, 0
    %v617 = vsel %vm226, %v353, 0
    %v620 = vsel %vm226, %v433, 0
    %v623 = vsel %vm226, %v438, 0
    %v626 = vsel %vm226, %v443, 0
    %v629 = vsel %vm226, %v448, 0
    %v632 = vsel %vm226, %v453, 0
    %v635 = vsel %vm226, %v458, 0
    %v638 = vsel %vm226, %v463, 0
    %v641 = vsel %vm226, %v468, 0
    %643 = vmatprep.subr.mxu0 0.0
    %644 = vmatpush1.xpose.msra.mxu0 0.0
    %645 = vmatprep.subr.mxu0 0.0
    %646 = vmatpush1.xpose.msra.mxu0 0.0
    %647 = vmatprep.subr.mxu0 0.0
    %648 = vmatpush1.xpose.msra.mxu0 0.0
    %649 = vmatprep.subr.mxu0 0.0
    %650 = vmatpush1.xpose.msra.mxu0 0.0
    %651 = vmatprep.subr.mxu0 0.0
    %652 = vmatpush1.xpose.msra.mxu0 0.0
    %653 = vmatprep.subr.mxu0 0.0
    %654 = vmatpush1.xpose.msra.mxu0 0.0
    %655 = vmatprep.subr.mxu0 0.0
    %656 = vmatpush1.xpose.msra.mxu0 0.0
    %657 = vmatprep.subr.mxu0 0.0
    %658 = vmatpush1.xpose.msra.mxu0 0.0
    %659 = vmatprep.subr.mxu0 0.0
    %660 = vmatpush1.xpose.msra.mxu0 %v641
    %661 = vmatprep.subr.mxu0 0.0
    %662 = vmatpush1.xpose.msra.mxu0 %v638
    %663 = vmatprep.subr.mxu0 0.0
    %664 = vmatpush1.xpose.msra.mxu0 %v635
    %665 = vmatprep.subr.mxu0 0.0
    %666 = vmatpush1.xpose.msra.mxu0 %v632
    %667 = vmatprep.subr.mxu0 0.0
    %668 = vmatpush1.xpose.msra.mxu0 %v629
    %669 = vmatprep.subr.mxu0 0.0
    %670 = vmatpush1.xpose.msra.mxu0 %v626
    %671 = vmatprep.subr.mxu0 0.0
    %672 = vmatpush1.xpose.msra.mxu0 %v623
    %673 = vmatprep.subr.mxu0 0.0
    %674 = vmatpush1.xpose.msra.mxu0 %v620
    %675 = vmatprep.subr.mxu0 0.0
    %676 = vmatpush2.xpose.msra.mxu0 0.0
    %677 = vmatprep.subr.mxu0 0.0
    %678 = vmatpush2.xpose.msra.mxu0 0.0
    %679 = vmatprep.subr.mxu0 0.0
    %680 = vmatpush2.xpose.msra.mxu0 0.0
    %681 = vmatprep.subr.mxu0 0.0
    %682 = vmatpush2.xpose.msra.mxu0 0.0
    %683 = vmatprep.subr.mxu0 0.0
    %684 = vmatpush2.xpose.msra.mxu0 0.0
    %685 = vmatprep.subr.mxu0 0.0
    %686 = vmatpush2.xpose.msra.mxu0 0.0
    %687 = vmatprep.subr.mxu0 0.0
    %688 = vmatpush2.xpose.msra.mxu0 0.0
    %689 = vmatprep.subr.mxu0 0.0
    %690 = vmatpush2.xpose.msra.mxu0 0.0
    %691 = vmatprep.subr.mxu0 0.0
    %692 = vmatpush2.xpose.msra.mxu0 0.0
    %693 = vmatprep.subr.mxu0 0.0
    %694 = vmatpush2.xpose.msra.mxu0 0.0
    %695 = vmatprep.subr.mxu0 0.0
    %696 = vmatpush2.xpose.msra.mxu0 0.0
    %697 = vmatprep.subr.mxu0 0.0
    %698 = vmatpush2.xpose.msra.mxu0 0.0
    %699 = vmatprep.subr.mxu0 0.0
    %700 = vmatpush2.xpose.msra.mxu0 0.0
    %701 = vmatprep.subr.mxu0 0.0
    %702 = vmatpush2.xpose.msra.mxu0 0.0
    %703 = vmatprep.subr.mxu0 0.0
    %704 = vmatpush2.xpose.msra.mxu0 0.0
    %705 = vmatprep.subr.mxu0 0.0
    %706 = vmatpush2.xpose.msra.mxu0 0.0
    %707 = vmatprep.mubr.f32.mxu0 0.0
    %708 = vmatmul.mubr.f32.gmra.mxu0 %v596
    %v709 = vpop.f32.mrf.mxu0
    %v710 = vadd.f32 0.0, %v709
    %v711 = vpop.f32.mrf.mxu0
    %712 = vmatprep.mubr.f32.mxu0 0.0
    %713 = vmatmul.mubr.f32.gmra.mxu0 %v599
    %v714 = vpop.f32.mrf.mxu0
    %v715 = vadd.f32 0.0, %v714
    %v716 = vpop.f32.mrf.mxu0
    %717 = vmatprep.mubr.f32.mxu0 0.0
    %718 = vmatmul.mubr.f32.gmra.mxu0 %v602
    %v719 = vpop.f32.mrf.mxu0
    %v720 = vadd.f32 0.0, %v719
    %v721 = vpop.f32.mrf.mxu0
    %722 = vmatprep.mubr.f32.mxu0 0.0
    %723 = vmatmul.mubr.f32.gmra.mxu0 %v605
    %v724 = vpop.f32.mrf.mxu0
    %v725 = vadd.f32 0.0, %v724
    %v726 = vpop.f32.mrf.mxu0
    %727 = vmatprep.mubr.f32.mxu0 0.0
    %728 = vmatmul.mubr.f32.gmra.mxu0 %v608
    %v729 = vpop.f32.mrf.mxu0
    %v730 = vadd.f32 0.0, %v729
    %v731 = vpop.f32.mrf.mxu0
    %732 = vmatprep.mubr.f32.mxu0 0.0
    %733 = vmatmul.mubr.f32.gmra.mxu0 %v611
    %v734 = vpop.f32.mrf.mxu0
    %v735 = vadd.f32 0.0, %v734
    %v736 = vpop.f32.mrf.mxu0
    %737 = vmatprep.mubr.f32.mxu0 0.0
    %738 = vmatmul.mubr.f32.gmra.mxu0 %v614
    %v739 = vpop.f32.mrf.mxu0
    %v740 = vadd.f32 0.0, %v739
    %v741 = vpop.f32.mrf.mxu0
    %742 = vmatprep.mubr.f32.mxu0 0.0
    %743 = vmatmul.mubr.f32.gmra.mxu0 %v617
    %v744 = vpop.f32.mrf.mxu0
    %v745 = vadd.f32 0.0, %v744
    %v746 = vpop.f32.mrf.mxu0
    %747 = vdwg.mxu0
    %v748 = vmul.f32 %v710, 0.17677669
    %v749 = vmul.f32 %v715, 0.17677669
    %v750 = vmul.f32 %v720, 0.17677669
    %v751 = vmul.f32 %v725, 0.17677669
    %v752 = vmul.f32 %v730, 0.17677669
    %v753 = vmul.f32 %v735, 0.17677669
    %v754 = vmul.f32 %v740, 0.17677669
    %v755 = vmul.f32 %v745, 0.17677669
    %v756 = vsub.f32 %v587, 1.0
    %v757 = vsub.f32 %v588, 1.0
    %v758 = vsub.f32 %v589, 1.0
    %v759 = vsub.f32 %v590, 1.0
    %v760 = vsub.f32 %v591, 1.0
    %v761 = vsub.f32 %v592, 1.0
    %v762 = vsub.f32 %v593, 1.0
    %v763 = vsub.f32 %v594, 1.0
    %v764 = vmul.f32 %v756, 1e+30
    %v765 = vmul.f32 %v757, 1e+30
    %v766 = vmul.f32 %v758, 1e+30
    %v767 = vmul.f32 %v759, 1e+30
    %v768 = vmul.f32 %v760, 1e+30
    %v769 = vmul.f32 %v761, 1e+30
    %v770 = vmul.f32 %v762, 1e+30
    %v771 = vmul.f32 %v763, 1e+30
    %v772 = vadd.f32 %v748, %v764
    %v773 = vadd.f32 %v749, %v765
    %v774 = vadd.f32 %v750, %v766
    %v775 = vadd.f32 %v751, %v767
    %v776 = vadd.f32 %v752, %v768
    %v777 = vadd.f32 %v753, %v769
    %v778 = vadd.f32 %v754, %v770
    %v779 = vadd.f32 %v755, %v771
    %v780 = vsel %vm87, %v772, -inf
    %781 = vmax.xlane.f32.xlu0 %v780
    %v782 = vpop.xlane.xlu0 %781
    %v783 = vsel %vm87, %v773, -inf
    %784 = vmax.xlane.f32.xlu0 %v783
    %v785 = vpop.xlane.xlu0 %784
    %v786 = vsel %vm87, %v774, -inf
    %787 = vmax.xlane.f32.xlu0 %v786
    %v788 = vpop.xlane.xlu0 %787
    %v789 = vsel %vm87, %v775, -inf
    %790 = vmax.xlane.f32.xlu0 %v789
    %v791 = vpop.xlane.xlu0 %790
    %v792 = vsel %vm87, %v776, -inf
    %793 = vmax.xlane.f32.xlu0 %v792
    %v794 = vpop.xlane.xlu0 %793
    %v795 = vsel %vm87, %v777, -inf
    %796 = vmax.xlane.f32.xlu0 %v795
    %v797 = vpop.xlane.xlu0 %796
    %v798 = vsel %vm87, %v778, -inf
    %799 = vmax.xlane.f32.xlu0 %v798
    %v800 = vpop.xlane.xlu0 %799
    %v801 = vsel %vm87, %v779, -inf
    %802 = vmax.xlane.f32.xlu0 %v801
    %v803 = vpop.xlane.xlu0 %802
    %v804 = vsub.f32 %v772, %v782
    %v805 = vsub.f32 %v773, %v785
    %v806 = vsub.f32 %v774, %v788
    %v807 = vsub.f32 %v775, %v791
    %v808 = vsub.f32 %v776, %v794
    %v809 = vsub.f32 %v777, %v797
    %v810 = vsub.f32 %v778, %v800
    %v811 = vsub.f32 %v779, %v803
    %v812 = vmul.f32 %v804, 1.442695
    %v813 = vpow.pop %v812
    %v814 = vmul.f32 %v805, 1.442695
    %v815 = vpow.pop %v814
    %v816 = vmul.f32 %v806, 1.442695
    %v817 = vpow.pop %v816
    %v818 = vmul.f32 %v807, 1.442695
    %v819 = vpow.pop %v818
    %v820 = vmul.f32 %v808, 1.442695
    %v821 = vpow.pop %v820
    %v822 = vmul.f32 %v809, 1.442695
    %v823 = vpow.pop %v822
    %v824 = vmul.f32 %v810, 1.442695
    %v825 = vpow.pop %v824
    %v826 = vmul.f32 %v811, 1.442695
    %v827 = vpow.pop %v826
    %v828 = vsel %vm87, %v813, 0.0
    %829 = vadd.xlane.f32.xlu0 %v828
    %v830 = vpop.xlane.xlu0 %829
    %v831 = vsel %vm87, %v815, 0.0
    %832 = vadd.xlane.f32.xlu0 %v831
    %v833 = vpop.xlane.xlu0 %832
    %v834 = vsel %vm87, %v817, 0.0
    %835 = vadd.xlane.f32.xlu0 %v834
    %v836 = vpop.xlane.xlu0 %835
    %v837 = vsel %vm87, %v819, 0.0
    %838 = vadd.xlane.f32.xlu0 %v837
    %v839 = vpop.xlane.xlu0 %838
    %v840 = vsel %vm87, %v821, 0.0
    %841 = vadd.xlane.f32.xlu0 %v840
    %v842 = vpop.xlane.xlu0 %841
    %v843 = vsel %vm87, %v823, 0.0
    %844 = vadd.xlane.f32.xlu0 %v843
    %v845 = vpop.xlane.xlu0 %844
    %v846 = vsel %vm87, %v825, 0.0
    %847 = vadd.xlane.f32.xlu0 %v846
    %v848 = vpop.xlane.xlu0 %847
    %v849 = vsel %vm87, %v827, 0.0
    %850 = vadd.xlane.f32.xlu0 %v849
    %v851 = vpop.xlane.xlu0 %850
    %v852 = vrcp.pop %v830
    %v853 = vrcp.pop %v833
    %v854 = vrcp.pop %v836
    %v855 = vrcp.pop %v839
    %v856 = vrcp.pop %v842
    %v857 = vrcp.pop %v845
    %v858 = vrcp.pop %v848
    %v859 = vrcp.pop %v851
    %v860 = vmul.f32 %v813, %v852
    %v861 = vmul.f32 %v815, %v853
    %v862 = vmul.f32 %v817, %v854
    %v863 = vmul.f32 %v819, %v855
    %v864 = vmul.f32 %v821, %v856
    %v865 = vmul.f32 %v823, %v857
    %v866 = vmul.f32 %v825, %v858
    %v867 = vmul.f32 %v827, %v859
    %v868 = vld [vmem:[#allocation7] sm:$0xff]
    %v869 = vld [vmem:[#allocation7 + $0x8] sm:$0xff]
    %v870 = vld [vmem:[#allocation7 + $0x10] sm:$0xff]
    %v871 = vld [vmem:[#allocation7 + $0x18] sm:$0xff]
    %872 = vmatprep.subr.mxu0 0.0
    %873 = vmatpush1.msra.mxu0 0.0
    %874 = vmatprep.subr.mxu0 0.0
    %875 = vmatpush1.msra.mxu0 0.0
    %876 = vmatprep.subr.mxu0 0.0
    %877 = vmatpush1.msra.mxu0 0.0
    %878 = vmatprep.subr.mxu0 0.0
    %879 = vmatpush1.msra.mxu0 0.0
    %880 = vmatprep.subr.mxu0 0.0
    %881 = vmatpush1.msra.mxu0 0.0
    %882 = vmatprep.subr.mxu0 0.0
    %883 = vmatpush1.msra.mxu0 0.0
    %884 = vmatprep.subr.mxu0 0.0
    %885 = vmatpush1.msra.mxu0 0.0
    %886 = vmatprep.subr.mxu0 0.0
    %887 = vmatpush1.msra.mxu0 0.0
    %888 = vmatprep.subr.mxu0 0.0
    %889 = vmatpush1.msra.mxu0 0.0
    %890 = vmatprep.subr.mxu0 0.0
    %891 = vmatpush1.msra.mxu0 0.0
    %892 = vmatprep.subr.mxu0 0.0
    %893 = vmatpush1.msra.mxu0 0.0
    %894 = vmatprep.subr.mxu0 0.0
    %895 = vmatpush1.msra.mxu0 0.0
    %896 = vmatprep.subr.mxu0 0.0
    %897 = vmatpush1.msra.mxu0 %v871
    %898 = vmatprep.subr.mxu0 0.0
    %899 = vmatpush1.msra.mxu0 %v870
    %900 = vmatprep.subr.mxu0 0.0
    %901 = vmatpush1.msra.mxu0 %v869
    %902 = vmatprep.subr.mxu0 0.0
    %903 = vmatpush1.msra.mxu0 %v868
    %904 = vmatprep.subr.mxu0 0.0
    %905 = vmatpush2.msra.mxu0 0.0
    %906 = vmatprep.subr.mxu0 0.0
    %907 = vmatpush2.msra.mxu0 0.0
    %908 = vmatprep.subr.mxu0 0.0
    %909 = vmatpush2.msra.mxu0 0.0
    %910 = vmatprep.subr.mxu0 0.0
    %911 = vmatpush2.msra.mxu0 0.0
    %912 = vmatprep.subr.mxu0 0.0
    %913 = vmatpush2.msra.mxu0 0.0
    %914 = vmatprep.subr.mxu0 0.0
    %915 = vmatpush2.msra.mxu0 0.0
    %916 = vmatprep.subr.mxu0 0.0
    %917 = vmatpush2.msra.mxu0 0.0
    %918 = vmatprep.subr.mxu0 0.0
    %919 = vmatpush2.msra.mxu0 0.0
    %920 = vmatprep.subr.mxu0 0.0
    %921 = vmatpush2.msra.mxu0 0.0
    %922 = vmatprep.subr.mxu0 0.0
    %923 = vmatpush2.msra.mxu0 0.0
    %924 = vmatprep.subr.mxu0 0.0
    %925 = vmatpush2.msra.mxu0 0.0
    %926 = vmatprep.subr.mxu0 0.0
    %927 = vmatpush2.msra.mxu0 0.0
    %928 = vmatprep.subr.mxu0 0.0
    %929 = vmatpush2.msra.mxu0 0.0
    %930 = vmatprep.subr.mxu0 0.0
    %931 = vmatpush2.msra.mxu0 0.0
    %932 = vmatprep.subr.mxu0 0.0
    %933 = vmatpush2.msra.mxu0 0.0
    %934 = vmatprep.subr.mxu0 0.0
    %935 = vmatpush2.msra.mxu0 0.0
    %936 = vmatprep.mubr.f32.mxu0 0.0
    %937 = vmatmul.mubr.f32.gmra.mxu0 %v596
    %v938 = vpop.f32.mrf.mxu0
    %v939 = vadd.f32 0.0, %v938
    %v940 = vpop.f32.mrf.mxu0
    %941 = vmatprep.mubr.f32.mxu0 0.0
    %942 = vmatmul.mubr.f32.gmra.mxu0 %v599
    %v943 = vpop.f32.mrf.mxu0
    %v944 = vadd.f32 0.0, %v943
    %v945 = vpop.f32.mrf.mxu0
    %946 = vmatprep.mubr.f32.mxu0 0.0
    %947 = vmatmul.mubr.f32.gmra.mxu0 %v602
    %v948 = vpop.f32.mrf.mxu0
    %v949 = vadd.f32 0.0, %v948
    %v950 = vpop.f32.mrf.mxu0
    %951 = vmatprep.mubr.f32.mxu0 0.0
    %952 = vmatmul.mubr.f32.gmra.mxu0 %v605
    %v953 = vpop.f32.mrf.mxu0
    %v954 = vadd.f32 0.0, %v953
    %v955 = vpop.f32.mrf.mxu0
    %956 = vmatprep.mubr.f32.mxu0 0.0
    %957 = vmatmul.mubr.f32.gmra.mxu0 %v608
    %v958 = vpop.f32.mrf.mxu0
    %v959 = vadd.f32 0.0, %v958
    %v960 = vpop.f32.mrf.mxu0
    %961 = vmatprep.mubr.f32.mxu0 0.0
    %962 = vmatmul.mubr.f32.gmra.mxu0 %v611
    %v963 = vpop.f32.mrf.mxu0
    %v964 = vadd.f32 0.0, %v963
    %v965 = vpop.f32.mrf.mxu0
    %966 = vmatprep.mubr.f32.mxu0 0.0
    %967 = vmatmul.mubr.f32.gmra.mxu0 %v614
    %v968 = vpop.f32.mrf.mxu0
    %v969 = vadd.f32 0.0, %v968
    %v970 = vpop.f32.mrf.mxu0
    %971 = vmatprep.mubr.f32.mxu0 0.0
    %972 = vmatmul.mubr.f32.gmra.mxu0 %v617
    %v973 = vpop.f32.mrf.mxu0
    %v974 = vadd.f32 0.0, %v973
    %v975 = vpop.f32.mrf.mxu0
    %976 = vdwg.mxu0
    %v977 = vmul.f32 %v939, %v587
    %v978 = vmul.f32 %v944, %v588
    %v979 = vmul.f32 %v949, %v589
    %v980 = vmul.f32 %v954, %v590
    %v981 = vmul.f32 %v959, %v591
    %v982 = vmul.f32 %v964, %v592
    %v983 = vmul.f32 %v969, %v593
    %v984 = vmul.f32 %v974, %v594
    %s985 = scalar_lea.vmem [#allocation2], 192
    %v986 = vld [vmem:[%s985] sm:$0xff]
    %v987 = vld [vmem:[%s985 + $0x8] sm:$0xff]
    %v988 = vld [vmem:[%s985 + $0x10] sm:$0xff]
    %v989 = vld [vmem:[%s985 + $0x18] sm:$0xff]
    %v990 = vld [vmem:[%s985 + $0x20] sm:$0xff]
    %v991 = vld [vmem:[%s985 + $0x28] sm:$0xff]
    %v992 = vld [vmem:[%s985 + $0x30] sm:$0xff]
    %v993 = vld [vmem:[%s985 + $0x38] sm:$0xff]
    %v995 = vsel %vm87, %v977, 0
    %v998 = vsel %vm87, %v978, 0
    %v1001 = vsel %vm87, %v979, 0
    %v1004 = vsel %vm87, %v980, 0
    %v1007 = vsel %vm87, %v981, 0
    %v1010 = vsel %vm87, %v982, 0
    %v1013 = vsel %vm87, %v983, 0
    %v1016 = vsel %vm87, %v984, 0
    %1018 = vmatprep.subr.mxu0 0.0
    %1019 = vmatpush1.msra.mxu0 0.0
    %1020 = vmatprep.subr.mxu0 0.0
    %1021 = vmatpush1.msra.mxu0 0.0
    %1022 = vmatprep.subr.mxu0 0.0
    %1023 = vmatpush1.msra.mxu0 0.0
    %1024 = vmatprep.subr.mxu0 0.0
    %1025 = vmatpush1.msra.mxu0 0.0
    %1026 = vmatprep.subr.mxu0 0.0
    %1027 = vmatpush1.msra.mxu0 0.0
    %1028 = vmatprep.subr.mxu0 0.0
    %1029 = vmatpush1.msra.mxu0 0.0
    %1030 = vmatprep.subr.mxu0 0.0
    %1031 = vmatpush1.msra.mxu0 0.0
    %1032 = vmatprep.subr.mxu0 0.0
    %1033 = vmatpush1.msra.mxu0 0.0
    %1034 = vmatprep.subr.mxu0 0.0
    %1035 = vmatpush1.msra.mxu0 %v993
    %1036 = vmatprep.subr.mxu0 0.0
    %1037 = vmatpush1.msra.mxu0 %v992
    %1038 = vmatprep.subr.mxu0 0.0
    %1039 = vmatpush1.msra.mxu0 %v991
    %1040 = vmatprep.subr.mxu0 0.0
    %1041 = vmatpush1.msra.mxu0 %v990
    %1042 = vmatprep.subr.mxu0 0.0
    %1043 = vmatpush1.msra.mxu0 %v989
    %1044 = vmatprep.subr.mxu0 0.0
    %1045 = vmatpush1.msra.mxu0 %v988
    %1046 = vmatprep.subr.mxu0 0.0
    %1047 = vmatpush1.msra.mxu0 %v987
    %1048 = vmatprep.subr.mxu0 0.0
    %1049 = vmatpush1.msra.mxu0 %v986
    %1050 = vmatprep.subr.mxu0 0.0
    %1051 = vmatpush2.msra.mxu0 0.0
    %1052 = vmatprep.subr.mxu0 0.0
    %1053 = vmatpush2.msra.mxu0 0.0
    %1054 = vmatprep.subr.mxu0 0.0
    %1055 = vmatpush2.msra.mxu0 0.0
    %1056 = vmatprep.subr.mxu0 0.0
    %1057 = vmatpush2.msra.mxu0 0.0
    %1058 = vmatprep.subr.mxu0 0.0
    %1059 = vmatpush2.msra.mxu0 0.0
    %1060 = vmatprep.subr.mxu0 0.0
    %1061 = vmatpush2.msra.mxu0 0.0
    %1062 = vmatprep.subr.mxu0 0.0
    %1063 = vmatpush2.msra.mxu0 0.0
    %1064 = vmatprep.subr.mxu0 0.0
    %1065 = vmatpush2.msra.mxu0 0.0
    %1066 = vmatprep.subr.mxu0 0.0
    %1067 = vmatpush2.msra.mxu0 0.0
    %1068 = vmatprep.subr.mxu0 0.0
    %1069 = vmatpush2.msra.mxu0 0.0
    %1070 = vmatprep.subr.mxu0 0.0
    %1071 = vmatpush2.msra.mxu0 0.0
    %1072 = vmatprep.subr.mxu0 0.0
    %1073 = vmatpush2.msra.mxu0 0.0
    %1074 = vmatprep.subr.mxu0 0.0
    %1075 = vmatpush2.msra.mxu0 0.0
    %1076 = vmatprep.subr.mxu0 0.0
    %1077 = vmatpush2.msra.mxu0 0.0
    %1078 = vmatprep.subr.mxu0 0.0
    %1079 = vmatpush2.msra.mxu0 0.0
    %1080 = vmatprep.subr.mxu0 0.0
    %1081 = vmatpush2.msra.mxu0 0.0
    %1082 = vmatprep.mubr.f32.mxu0 0.0
    %1083 = vmatmul.mubr.f32.gmra.mxu0 %v995
    %v1084 = vpop.f32.mrf.mxu0
    %v1085 = vadd.f32 0.0, %v1084
    %v1086 = vpop.f32.mrf.mxu0
    %1087 = vmatprep.mubr.f32.mxu0 0.0
    %1088 = vmatmul.mubr.f32.gmra.mxu0 %v998
    %v1089 = vpop.f32.mrf.mxu0
    %v1090 = vadd.f32 0.0, %v1089
    %v1091 = vpop.f32.mrf.mxu0
    %1092 = vmatprep.mubr.f32.mxu0 0.0
    %1093 = vmatmul.mubr.f32.gmra.mxu0 %v1001
    %v1094 = vpop.f32.mrf.mxu0
    %v1095 = vadd.f32 0.0, %v1094
    %v1096 = vpop.f32.mrf.mxu0
    %1097 = vmatprep.mubr.f32.mxu0 0.0
    %1098 = vmatmul.mubr.f32.gmra.mxu0 %v1004
    %v1099 = vpop.f32.mrf.mxu0
    %v1100 = vadd.f32 0.0, %v1099
    %v1101 = vpop.f32.mrf.mxu0
    %1102 = vmatprep.mubr.f32.mxu0 0.0
    %1103 = vmatmul.mubr.f32.gmra.mxu0 %v1007
    %v1104 = vpop.f32.mrf.mxu0
    %v1105 = vadd.f32 0.0, %v1104
    %v1106 = vpop.f32.mrf.mxu0
    %1107 = vmatprep.mubr.f32.mxu0 0.0
    %1108 = vmatmul.mubr.f32.gmra.mxu0 %v1010
    %v1109 = vpop.f32.mrf.mxu0
    %v1110 = vadd.f32 0.0, %v1109
    %v1111 = vpop.f32.mrf.mxu0
    %1112 = vmatprep.mubr.f32.mxu0 0.0
    %1113 = vmatmul.mubr.f32.gmra.mxu0 %v1013
    %v1114 = vpop.f32.mrf.mxu0
    %v1115 = vadd.f32 0.0, %v1114
    %v1116 = vpop.f32.mrf.mxu0
    %1117 = vmatprep.mubr.f32.mxu0 0.0
    %1118 = vmatmul.mubr.f32.gmra.mxu0 %v1016
    %v1119 = vpop.f32.mrf.mxu0
    %v1120 = vadd.f32 0.0, %v1119
    %v1121 = vpop.f32.mrf.mxu0
    %1122 = vdwg.mxu0
    %s1123 = scalar_lea.vmem [#allocation2], 256
    %v1124 = vld [vmem:[%s1123] sm:$0xff]
    %v1125 = vld [vmem:[%s1123 + $0x8] sm:$0xff]
    %v1126 = vld [vmem:[%s1123 + $0x10] sm:$0xff]
    %v1127 = vld [vmem:[%s1123 + $0x18] sm:$0xff]
    %v1128 = vld [vmem:[%s1123 + $0x20] sm:$0xff]
    %v1129 = vld [vmem:[%s1123 + $0x28] sm:$0xff]
    %v1130 = vld [vmem:[%s1123 + $0x30] sm:$0xff]
    %v1131 = vld [vmem:[%s1123 + $0x38] sm:$0xff]
    %v1132 = vmul.f32 %v1085, %v1124
    %v1133 = vmul.f32 %v1090, %v1125
    %v1134 = vmul.f32 %v1095, %v1126
    %v1135 = vmul.f32 %v1100, %v1127
    %v1136 = vmul.f32 %v1105, %v1128
    %v1137 = vmul.f32 %v1110, %v1129
    %v1138 = vmul.f32 %v1115, %v1130
    %v1139 = vmul.f32 %v1120, %v1131
    %s1140 = scalar_lea.vmem [#allocation2], 320
    %v1141 = vld [vmem:[%s1140] sm:$0xff]
    %v1142 = vld [vmem:[%s1140 + $0x8] sm:$0xff]
    %v1143 = vld [vmem:[%s1140 + $0x10] sm:$0xff]
    %v1144 = vld [vmem:[%s1140 + $0x18] sm:$0xff]
    %v1145 = vld [vmem:[%s1140 + $0x20] sm:$0xff]
    %v1146 = vld [vmem:[%s1140 + $0x28] sm:$0xff]
    %v1147 = vld [vmem:[%s1140 + $0x30] sm:$0xff]
    %v1148 = vld [vmem:[%s1140 + $0x38] sm:$0xff]
    %v1150 = vsel %vm87, %v1132, 0
    %v1153 = vsel %vm87, %v1133, 0
    %v1156 = vsel %vm87, %v1134, 0
    %v1159 = vsel %vm87, %v1135, 0
    %v1162 = vsel %vm87, %v1136, 0
    %v1165 = vsel %vm87, %v1137, 0
    %v1168 = vsel %vm87, %v1138, 0
    %v1171 = vsel %vm87, %v1139, 0
    %1173 = vmatprep.subr.mxu0 0.0
    %1174 = vmatpush1.msra.mxu0 0.0
    %1175 = vmatprep.subr.mxu0 0.0
    %1176 = vmatpush1.msra.mxu0 0.0
    %1177 = vmatprep.subr.mxu0 0.0
    %1178 = vmatpush1.msra.mxu0 0.0
    %1179 = vmatprep.subr.mxu0 0.0
    %1180 = vmatpush1.msra.mxu0 0.0
    %1181 = vmatprep.subr.mxu0 0.0
    %1182 = vmatpush1.msra.mxu0 0.0
    %1183 = vmatprep.subr.mxu0 0.0
    %1184 = vmatpush1.msra.mxu0 0.0
    %1185 = vmatprep.subr.mxu0 0.0
    %1186 = vmatpush1.msra.mxu0 0.0
    %1187 = vmatprep.subr.mxu0 0.0
    %1188 = vmatpush1.msra.mxu0 0.0
    %1189 = vmatprep.subr.mxu0 0.0
    %1190 = vmatpush1.msra.mxu0 %v1148
    %1191 = vmatprep.subr.mxu0 0.0
    %1192 = vmatpush1.msra.mxu0 %v1147
    %1193 = vmatprep.subr.mxu0 0.0
    %1194 = vmatpush1.msra.mxu0 %v1146
    %1195 = vmatprep.subr.mxu0 0.0
    %1196 = vmatpush1.msra.mxu0 %v1145
    %1197 = vmatprep.subr.mxu0 0.0
    %1198 = vmatpush1.msra.mxu0 %v1144
    %1199 = vmatprep.subr.mxu0 0.0
    %1200 = vmatpush1.msra.mxu0 %v1143
    %1201 = vmatprep.subr.mxu0 0.0
    %1202 = vmatpush1.msra.mxu0 %v1142
    %1203 = vmatprep.subr.mxu0 0.0
    %1204 = vmatpush1.msra.mxu0 %v1141
    %1205 = vmatprep.subr.mxu0 0.0
    %1206 = vmatpush2.msra.mxu0 0.0
    %1207 = vmatprep.subr.mxu0 0.0
    %1208 = vmatpush2.msra.mxu0 0.0
    %1209 = vmatprep.subr.mxu0 0.0
    %1210 = vmatpush2.msra.mxu0 0.0
    %1211 = vmatprep.subr.mxu0 0.0
    %1212 = vmatpush2.msra.mxu0 0.0
    %1213 = vmatprep.subr.mxu0 0.0
    %1214 = vmatpush2.msra.mxu0 0.0
    %1215 = vmatprep.subr.mxu0 0.0
    %1216 = vmatpush2.msra.mxu0 0.0
    %1217 = vmatprep.subr.mxu0 0.0
    %1218 = vmatpush2.msra.mxu0 0.0
    %1219 = vmatprep.subr.mxu0 0.0
    %1220 = vmatpush2.msra.mxu0 0.0
    %1221 = vmatprep.subr.mxu0 0.0
    %1222 = vmatpush2.msra.mxu0 0.0
    %1223 = vmatprep.subr.mxu0 0.0
    %1224 = vmatpush2.msra.mxu0 0.0
    %1225 = vmatprep.subr.mxu0 0.0
    %1226 = vmatpush2.msra.mxu0 0.0
    %1227 = vmatprep.subr.mxu0 0.0
    %1228 = vmatpush2.msra.mxu0 0.0
    %1229 = vmatprep.subr.mxu0 0.0
    %1230 = vmatpush2.msra.mxu0 0.0
    %1231 = vmatprep.subr.mxu0 0.0
    %1232 = vmatpush2.msra.mxu0 0.0
    %1233 = vmatprep.subr.mxu0 0.0
    %1234 = vmatpush2.msra.mxu0 0.0
    %1235 = vmatprep.subr.mxu0 0.0
    %1236 = vmatpush2.msra.mxu0 0.0
    %1237 = vmatprep.mubr.f32.mxu0 0.0
    %1238 = vmatmul.mubr.f32.gmra.mxu0 %v1150
    %v1239 = vpop.f32.mrf.mxu0
    %v1240 = vadd.f32 0.0, %v1239
    %v1241 = vpop.f32.mrf.mxu0
    %1242 = vmatprep.mubr.f32.mxu0 0.0
    %1243 = vmatmul.mubr.f32.gmra.mxu0 %v1153
    %v1244 = vpop.f32.mrf.mxu0
    %v1245 = vadd.f32 0.0, %v1244
    %v1246 = vpop.f32.mrf.mxu0
    %1247 = vmatprep.mubr.f32.mxu0 0.0
    %1248 = vmatmul.mubr.f32.gmra.mxu0 %v1156
    %v1249 = vpop.f32.mrf.mxu0
    %v1250 = vadd.f32 0.0, %v1249
    %v1251 = vpop.f32.mrf.mxu0
    %1252 = vmatprep.mubr.f32.mxu0 0.0
    %1253 = vmatmul.mubr.f32.gmra.mxu0 %v1159
    %v1254 = vpop.f32.mrf.mxu0
    %v1255 = vadd.f32 0.0, %v1254
    %v1256 = vpop.f32.mrf.mxu0
    %1257 = vmatprep.mubr.f32.mxu0 0.0
    %1258 = vmatmul.mubr.f32.gmra.mxu0 %v1162
    %v1259 = vpop.f32.mrf.mxu0
    %v1260 = vadd.f32 0.0, %v1259
    %v1261 = vpop.f32.mrf.mxu0
    %1262 = vmatprep.mubr.f32.mxu0 0.0
    %1263 = vmatmul.mubr.f32.gmra.mxu0 %v1165
    %v1264 = vpop.f32.mrf.mxu0
    %v1265 = vadd.f32 0.0, %v1264
    %v1266 = vpop.f32.mrf.mxu0
    %1267 = vmatprep.mubr.f32.mxu0 0.0
    %1268 = vmatmul.mubr.f32.gmra.mxu0 %v1168
    %v1269 = vpop.f32.mrf.mxu0
    %v1270 = vadd.f32 0.0, %v1269
    %v1271 = vpop.f32.mrf.mxu0
    %1272 = vmatprep.mubr.f32.mxu0 0.0
    %1273 = vmatmul.mubr.f32.gmra.mxu0 %v1171
    %v1274 = vpop.f32.mrf.mxu0
    %v1275 = vadd.f32 0.0, %v1274
    %v1276 = vpop.f32.mrf.mxu0
    %1277 = vdwg.mxu0
    %v1278 = vmul.f32 %v1240, %v587
    %v1279 = vmul.f32 %v1245, %v588
    %v1280 = vmul.f32 %v1250, %v589
    %v1281 = vmul.f32 %v1255, %v590
    %v1282 = vmul.f32 %v1260, %v591
    %v1283 = vmul.f32 %v1265, %v592
    %v1284 = vmul.f32 %v1270, %v593
    %v1285 = vmul.f32 %v1275, %v594
    %v1286 = vadd.f32 %v860, %v1278
    %v1287 = vadd.f32 %v861, %v1279
    %v1288 = vadd.f32 %v862, %v1280
    %v1289 = vadd.f32 %v863, %v1281
    %v1290 = vadd.f32 %v864, %v1282
    %v1291 = vadd.f32 %v865, %v1283
    %v1292 = vadd.f32 %v866, %v1284
    %v1293 = vadd.f32 %v867, %v1285
    %v1295 = vsel %vm87, %v1286, 0
    %v1298 = vsel %vm87, %v1287, 0
    %v1301 = vsel %vm87, %v1288, 0
    %v1304 = vsel %vm87, %v1289, 0
    %v1307 = vsel %vm87, %v1290, 0
    %v1310 = vsel %vm87, %v1291, 0
    %v1313 = vsel %vm87, %v1292, 0
    %v1316 = vsel %vm87, %v1293, 0
    %1318 = vmatprep.subr.mxu0 0.0
    %1319 = vmatpush1.msra.mxu0 0.0
    %1320 = vmatprep.subr.mxu0 0.0
    %1321 = vmatpush1.msra.mxu0 0.0
    %1322 = vmatprep.subr.mxu0 0.0
    %1323 = vmatpush1.msra.mxu0 0.0
    %1324 = vmatprep.subr.mxu0 0.0
    %1325 = vmatpush1.msra.mxu0 0.0
    %1326 = vmatprep.subr.mxu0 0.0
    %1327 = vmatpush1.msra.mxu0 0.0
    %1328 = vmatprep.subr.mxu0 0.0
    %1329 = vmatpush1.msra.mxu0 0.0
    %1330 = vmatprep.subr.mxu0 0.0
    %1331 = vmatpush1.msra.mxu0 0.0
    %1332 = vmatprep.subr.mxu0 0.0
    %1333 = vmatpush1.msra.mxu0 0.0
    %1334 = vmatprep.subr.mxu0 0.0
    %1335 = vmatpush1.msra.mxu0 %v583
    %1336 = vmatprep.subr.mxu0 0.0
    %1337 = vmatpush1.msra.mxu0 %v578
    %1338 = vmatprep.subr.mxu0 0.0
    %1339 = vmatpush1.msra.mxu0 %v573
    %1340 = vmatprep.subr.mxu0 0.0
    %1341 = vmatpush1.msra.mxu0 %v568
    %1342 = vmatprep.subr.mxu0 0.0
    %1343 = vmatpush1.msra.mxu0 %v563
    %1344 = vmatprep.subr.mxu0 0.0
    %1345 = vmatpush1.msra.mxu0 %v558
    %1346 = vmatprep.subr.mxu0 0.0
    %1347 = vmatpush1.msra.mxu0 %v553
    %1348 = vmatprep.subr.mxu0 0.0
    %1349 = vmatpush1.msra.mxu0 %v548
    %1350 = vmatprep.subr.mxu0 0.0
    %1351 = vmatpush2.msra.mxu0 0.0
    %1352 = vmatprep.subr.mxu0 0.0
    %1353 = vmatpush2.msra.mxu0 0.0
    %1354 = vmatprep.subr.mxu0 0.0
    %1355 = vmatpush2.msra.mxu0 0.0
    %1356 = vmatprep.subr.mxu0 0.0
    %1357 = vmatpush2.msra.mxu0 0.0
    %1358 = vmatprep.subr.mxu0 0.0
    %1359 = vmatpush2.msra.mxu0 0.0
    %1360 = vmatprep.subr.mxu0 0.0
    %1361 = vmatpush2.msra.mxu0 0.0
    %1362 = vmatprep.subr.mxu0 0.0
    %1363 = vmatpush2.msra.mxu0 0.0
    %1364 = vmatprep.subr.mxu0 0.0
    %1365 = vmatpush2.msra.mxu0 0.0
    %1366 = vmatprep.subr.mxu0 0.0
    %1367 = vmatpush2.msra.mxu0 0.0
    %1368 = vmatprep.subr.mxu0 0.0
    %1369 = vmatpush2.msra.mxu0 0.0
    %1370 = vmatprep.subr.mxu0 0.0
    %1371 = vmatpush2.msra.mxu0 0.0
    %1372 = vmatprep.subr.mxu0 0.0
    %1373 = vmatpush2.msra.mxu0 0.0
    %1374 = vmatprep.subr.mxu0 0.0
    %1375 = vmatpush2.msra.mxu0 0.0
    %1376 = vmatprep.subr.mxu0 0.0
    %1377 = vmatpush2.msra.mxu0 0.0
    %1378 = vmatprep.subr.mxu0 0.0
    %1379 = vmatpush2.msra.mxu0 0.0
    %1380 = vmatprep.subr.mxu0 0.0
    %1381 = vmatpush2.msra.mxu0 0.0
    %1382 = vmatprep.mubr.f32.mxu0 0.0
    %1383 = vmatmul.mubr.f32.gmra.mxu0 %v1295
    %v1384 = vpop.f32.mrf.mxu0
    %v1385 = vadd.f32 0.0, %v1384
    %v1386 = vpop.f32.mrf.mxu0
    %1387 = vmatprep.mubr.f32.mxu0 0.0
    %1388 = vmatmul.mubr.f32.gmra.mxu0 %v1298
    %v1389 = vpop.f32.mrf.mxu0
    %v1390 = vadd.f32 0.0, %v1389
    %v1391 = vpop.f32.mrf.mxu0
    %1392 = vmatprep.mubr.f32.mxu0 0.0
    %1393 = vmatmul.mubr.f32.gmra.mxu0 %v1301
    %v1394 = vpop.f32.mrf.mxu0
    %v1395 = vadd.f32 0.0, %v1394
    %v1396 = vpop.f32.mrf.mxu0
    %1397 = vmatprep.mubr.f32.mxu0 0.0
    %1398 = vmatmul.mubr.f32.gmra.mxu0 %v1304
    %v1399 = vpop.f32.mrf.mxu0
    %v1400 = vadd.f32 0.0, %v1399
    %v1401 = vpop.f32.mrf.mxu0
    %1402 = vmatprep.mubr.f32.mxu0 0.0
    %1403 = vmatmul.mubr.f32.gmra.mxu0 %v1307
    %v1404 = vpop.f32.mrf.mxu0
    %v1405 = vadd.f32 0.0, %v1404
    %v1406 = vpop.f32.mrf.mxu0
    %1407 = vmatprep.mubr.f32.mxu0 0.0
    %1408 = vmatmul.mubr.f32.gmra.mxu0 %v1310
    %v1409 = vpop.f32.mrf.mxu0
    %v1410 = vadd.f32 0.0, %v1409
    %v1411 = vpop.f32.mrf.mxu0
    %1412 = vmatprep.mubr.f32.mxu0 0.0
    %1413 = vmatmul.mubr.f32.gmra.mxu0 %v1313
    %v1414 = vpop.f32.mrf.mxu0
    %v1415 = vadd.f32 0.0, %v1414
    %v1416 = vpop.f32.mrf.mxu0
    %1417 = vmatprep.mubr.f32.mxu0 0.0
    %1418 = vmatmul.mubr.f32.gmra.mxu0 %v1316
    %v1419 = vpop.f32.mrf.mxu0
    %v1420 = vadd.f32 0.0, %v1419
    %v1421 = vpop.f32.mrf.mxu0
    %1422 = vdwg.mxu0
    %s1423 = scalar_lea.vmem [#allocation5], 96
    %v1424 = vld [vmem:[%s1423] sm:$0xff]
    %v1425 = vld [vmem:[%s1423 + $0x8] sm:$0xff]
    %v1426 = vld [vmem:[%s1423 + $0x10] sm:$0xff]
    %v1427 = vld [vmem:[%s1423 + $0x18] sm:$0xff]
    %v1428 = vld [vmem:[%s6 + $0x3] sm:$0x1]
    %v1429 = vlaneseq
    %v1430 = vshrl.u32 %v1429, 7
    %v1431 = vsub.s32 0, %v1430
    %v1432 = vrot.slane %v1428, %v1431
    %v1434 = vsel %vm226, %v1385, 0
    %v1437 = vsel %vm226, %v1390, 0
    %v1440 = vsel %vm226, %v1395, 0
    %v1443 = vsel %vm226, %v1400, 0
    %v1446 = vsel %vm226, %v1405, 0
    %v1449 = vsel %vm226, %v1410, 0
    %v1452 = vsel %vm226, %v1415, 0
    %v1455 = vsel %vm226, %v1420, 0
    %1457 = vmatprep.subr.mxu0 0.0
    %1458 = vmatpush1.msra.mxu0 0.0
    %1459 = vmatprep.subr.mxu0 0.0
    %1460 = vmatpush1.msra.mxu0 0.0
    %1461 = vmatprep.subr.mxu0 0.0
    %1462 = vmatpush1.msra.mxu0 0.0
    %1463 = vmatprep.subr.mxu0 0.0
    %1464 = vmatpush1.msra.mxu0 0.0
    %1465 = vmatprep.subr.mxu0 0.0
    %1466 = vmatpush1.msra.mxu0 0.0
    %1467 = vmatprep.subr.mxu0 0.0
    %1468 = vmatpush1.msra.mxu0 0.0
    %1469 = vmatprep.subr.mxu0 0.0
    %1470 = vmatpush1.msra.mxu0 0.0
    %1471 = vmatprep.subr.mxu0 0.0
    %1472 = vmatpush1.msra.mxu0 0.0
    %1473 = vmatprep.subr.mxu0 0.0
    %1474 = vmatpush1.msra.mxu0 0.0
    %1475 = vmatprep.subr.mxu0 0.0
    %1476 = vmatpush1.msra.mxu0 0.0
    %1477 = vmatprep.subr.mxu0 0.0
    %1478 = vmatpush1.msra.mxu0 0.0
    %1479 = vmatprep.subr.mxu0 0.0
    %1480 = vmatpush1.msra.mxu0 0.0
    %1481 = vmatprep.subr.mxu0 0.0
    %1482 = vmatpush1.msra.mxu0 %v1427
    %1483 = vmatprep.subr.mxu0 0.0
    %1484 = vmatpush1.msra.mxu0 %v1426
    %1485 = vmatprep.subr.mxu0 0.0
    %1486 = vmatpush1.msra.mxu0 %v1425
    %1487 = vmatprep.subr.mxu0 0.0
    %1488 = vmatpush1.msra.mxu0 %v1424
    %1489 = vmatprep.subr.mxu0 0.0
    %1490 = vmatpush2.msra.mxu0 0.0
    %1491 = vmatprep.subr.mxu0 0.0
    %1492 = vmatpush2.msra.mxu0 0.0
    %1493 = vmatprep.subr.mxu0 0.0
    %1494 = vmatpush2.msra.mxu0 0.0
    %1495 = vmatprep.subr.mxu0 0.0
    %1496 = vmatpush2.msra.mxu0 0.0
    %1497 = vmatprep.subr.mxu0 0.0
    %1498 = vmatpush2.msra.mxu0 0.0
    %1499 = vmatprep.subr.mxu0 0.0
    %1500 = vmatpush2.msra.mxu0 0.0
    %1501 = vmatprep.subr.mxu0 0.0
    %1502 = vmatpush2.msra.mxu0 0.0
    %1503 = vmatprep.subr.mxu0 0.0
    %1504 = vmatpush2.msra.mxu0 0.0
    %1505 = vmatprep.subr.mxu0 0.0
    %1506 = vmatpush2.msra.mxu0 0.0
    %1507 = vmatprep.subr.mxu0 0.0
    %1508 = vmatpush2.msra.mxu0 0.0
    %1509 = vmatprep.subr.mxu0 0.0
    %1510 = vmatpush2.msra.mxu0 0.0
    %1511 = vmatprep.subr.mxu0 0.0
    %1512 = vmatpush2.msra.mxu0 0.0
    %1513 = vmatprep.subr.mxu0 0.0
    %1514 = vmatpush2.msra.mxu0 0.0
    %1515 = vmatprep.subr.mxu0 0.0
    %1516 = vmatpush2.msra.mxu0 0.0
    %1517 = vmatprep.subr.mxu0 0.0
    %1518 = vmatpush2.msra.mxu0 0.0
    %1519 = vmatprep.subr.mxu0 0.0
    %1520 = vmatpush2.msra.mxu0 0.0
    %1521 = vmatprep.mubr.f32.mxu0 0.0
    %1522 = vmatmul.mubr.f32.gmra.mxu0 %v1434
    %v1523 = vpop.f32.mrf.mxu0
    %v1524 = vadd.f32 %v1432, %v1523
    %v1525 = vpop.f32.mrf.mxu0
    %1526 = vmatprep.mubr.f32.mxu0 0.0
    %1527 = vmatmul.mubr.f32.gmra.mxu0 %v1437
    %v1528 = vpop.f32.mrf.mxu0
    %v1529 = vadd.f32 %v1432, %v1528
    %v1530 = vpop.f32.mrf.mxu0
    %1531 = vmatprep.mubr.f32.mxu0 0.0
    %1532 = vmatmul.mubr.f32.gmra.mxu0 %v1440
    %v1533 = vpop.f32.mrf.mxu0
    %v1534 = vadd.f32 %v1432, %v1533
    %v1535 = vpop.f32.mrf.mxu0
    %1536 = vmatprep.mubr.f32.mxu0 0.0
    %1537 = vmatmul.mubr.f32.gmra.mxu0 %v1443
    %v1538 = vpop.f32.mrf.mxu0
    %v1539 = vadd.f32 %v1432, %v1538
    %v1540 = vpop.f32.mrf.mxu0
    %1541 = vmatprep.mubr.f32.mxu0 0.0
    %1542 = vmatmul.mubr.f32.gmra.mxu0 %v1446
    %v1543 = vpop.f32.mrf.mxu0
    %v1544 = vadd.f32 %v1432, %v1543
    %v1545 = vpop.f32.mrf.mxu0
    %1546 = vmatprep.mubr.f32.mxu0 0.0
    %1547 = vmatmul.mubr.f32.gmra.mxu0 %v1449
    %v1548 = vpop.f32.mrf.mxu0
    %v1549 = vadd.f32 %v1432, %v1548
    %v1550 = vpop.f32.mrf.mxu0
    %1551 = vmatprep.mubr.f32.mxu0 0.0
    %1552 = vmatmul.mubr.f32.gmra.mxu0 %v1452
    %v1553 = vpop.f32.mrf.mxu0
    %v1554 = vadd.f32 %v1432, %v1553
    %v1555 = vpop.f32.mrf.mxu0
    %1556 = vmatprep.mubr.f32.mxu0 0.0
    %1557 = vmatmul.mubr.f32.gmra.mxu0 %v1455
    %v1558 = vpop.f32.mrf.mxu0
    %v1559 = vadd.f32 %v1432, %v1558
    %v1560 = vpop.f32.mrf.mxu0
    %1561 = vdwg.mxu0
    %v1562 = vadd.f32 %v1524, %v179
    %v1563 = vadd.f32 %v1529, %v184
    %v1564 = vadd.f32 %v1534, %v189
    %v1565 = vadd.f32 %v1539, %v194
    %v1566 = vadd.f32 %v1544, %v199
    %v1567 = vadd.f32 %v1549, %v204
    %v1568 = vadd.f32 %v1554, %v209
    %v1569 = vadd.f32 %v1559, %v214
    %v1570 = vld [vmem:[%s7] sm:$0xff]
    %v1571 = vld [vmem:[%s7 + $0x8] sm:$0xff]
    %v1572 = vld [vmem:[%s7 + $0x10] sm:$0xff]
    %v1573 = vld [vmem:[%s7 + $0x18] sm:$0xff]
    %v1574 = vsel %vm226, %v1562, 0.0
    %1575 = vadd.xlane.f32.xlu0 %v1574
    %v1576 = vpop.xlane.xlu0 %1575
    %v1577 = vsel %vm226, %v1563, 0.0
    %1578 = vadd.xlane.f32.xlu0 %v1577
    %v1579 = vpop.xlane.xlu0 %1578
    %v1580 = vsel %vm226, %v1564, 0.0
    %1581 = vadd.xlane.f32.xlu0 %v1580
    %v1582 = vpop.xlane.xlu0 %1581
    %v1583 = vsel %vm226, %v1565, 0.0
    %1584 = vadd.xlane.f32.xlu0 %v1583
    %v1585 = vpop.xlane.xlu0 %1584
    %v1586 = vsel %vm226, %v1566, 0.0
    %1587 = vadd.xlane.f32.xlu0 %v1586
    %v1588 = vpop.xlane.xlu0 %1587
    %v1589 = vsel %vm226, %v1567, 0.0
    %1590 = vadd.xlane.f32.xlu0 %v1589
    %v1591 = vpop.xlane.xlu0 %1590
    %v1592 = vsel %vm226, %v1568, 0.0
    %1593 = vadd.xlane.f32.xlu0 %v1592
    %v1594 = vpop.xlane.xlu0 %1593
    %v1595 = vsel %vm226, %v1569, 0.0
    %1596 = vadd.xlane.f32.xlu0 %v1595
    %v1597 = vpop.xlane.xlu0 %1596
    %v1598 = vadd.f32 %v1576, %v1588
    %v1599 = vadd.f32 %v1579, %v1591
    %v1600 = vadd.f32 %v1582, %v1594
    %v1601 = vadd.f32 %v1585, %v1597
    %v1602 = vmul.f32 %v1562, %v1562
    %v1603 = vmul.f32 %v1563, %v1563
    %v1604 = vmul.f32 %v1564, %v1564
    %v1605 = vmul.f32 %v1565, %v1565
    %v1606 = vmul.f32 %v1566, %v1566
    %v1607 = vmul.f32 %v1567, %v1567
    %v1608 = vmul.f32 %v1568, %v1568
    %v1609 = vmul.f32 %v1569, %v1569
    %v1610 = vsel %vm226, %v1602, 0.0
    %1611 = vadd.xlane.f32.xlu0 %v1610
    %v1612 = vpop.xlane.xlu0 %1611
    %v1613 = vsel %vm226, %v1603, 0.0
    %1614 = vadd.xlane.f32.xlu0 %v1613
    %v1615 = vpop.xlane.xlu0 %1614
    %v1616 = vsel %vm226, %v1604, 0.0
    %1617 = vadd.xlane.f32.xlu0 %v1616
    %v1618 = vpop.xlane.xlu0 %1617
    %v1619 = vsel %vm226, %v1605, 0.0
    %1620 = vadd.xlane.f32.xlu0 %v1619
    %v1621 = vpop.xlane.xlu0 %1620
    %v1622 = vsel %vm226, %v1606, 0.0
    %1623 = vadd.xlane.f32.xlu0 %v1622
    %v1624 = vpop.xlane.xlu0 %1623
    %v1625 = vsel %vm226, %v1607, 0.0
    %1626 = vadd.xlane.f32.xlu0 %v1625
    %v1627 = vpop.xlane.xlu0 %1626
    %v1628 = vsel %vm226, %v1608, 0.0
    %1629 = vadd.xlane.f32.xlu0 %v1628
    %v1630 = vpop.xlane.xlu0 %1629
    %v1631 = vsel %vm226, %v1609, 0.0
    %1632 = vadd.xlane.f32.xlu0 %v1631
    %v1633 = vpop.xlane.xlu0 %1632
    %v1634 = vadd.f32 %v1612, %v1624
    %v1635 = vadd.f32 %v1615, %v1627
    %v1636 = vadd.f32 %v1618, %v1630
    %v1637 = vadd.f32 %v1621, %v1633
    %v1638 = vmul.f32 %v1598, 0.015625
    %v1639 = vmul.f32 %v1599, 0.015625
    %v1640 = vmul.f32 %v1600, 0.015625
    %v1641 = vmul.f32 %v1601, 0.015625
    %v1642 = vmul.f32 %v1634, 0.015625
    %v1643 = vmul.f32 %v1635, 0.015625
    %v1644 = vmul.f32 %v1636, 0.015625
    %v1645 = vmul.f32 %v1637, 0.015625
    %v1646 = vmul.f32 %v1638, %v1638
    %v1647 = vmul.f32 %v1639, %v1639
    %v1648 = vmul.f32 %v1640, %v1640
    %v1649 = vmul.f32 %v1641, %v1641
    %v1650 = vsub.f32 %v1642, %v1646
    %v1651 = vsub.f32 %v1643, %v1647
    %v1652 = vsub.f32 %v1644, %v1648
    %v1653 = vsub.f32 %v1645, %v1649
    %v1654 = vadd.f32 %v1650, 1e-05
    %v1655 = vadd.f32 %v1651, 1e-05
    %v1656 = vadd.f32 %v1652, 1e-05
    %v1657 = vadd.f32 %v1653, 1e-05
    %v1658 = vrsqrt.pop %v1654
    %v1659 = vrsqrt.pop %v1655
    %v1660 = vrsqrt.pop %v1656
    %v1661 = vrsqrt.pop %v1657
    %v1662 = vmul.f32 %v1658, %v1570
    %v1663 = vmul.f32 %v1659, %v1571
    %v1664 = vmul.f32 %v1660, %v1572
    %v1665 = vmul.f32 %v1661, %v1573
    %v1666 = vmul.f32 %v1638, %v1662
    %v1667 = vmul.f32 %v1639, %v1663
    %v1668 = vmul.f32 %v1640, %v1664
    %v1669 = vmul.f32 %v1641, %v1665
    %1674 = vrot.lane.b32.xlu0 %v1666, 1
    %v1675 = vpop.permute.xlu0 %1674
    %1676 = vrot.lane.b32.xlu0 %v1667, 1
    %v1677 = vpop.permute.xlu0 %1676
    %1678 = vrot.lane.b32.xlu0 %v1668, 1
    %v1679 = vpop.permute.xlu0 %1678
    %1680 = vrot.lane.b32.xlu0 %v1669, 1
    %v1681 = vpop.permute.xlu0 %1680
    %v1686 = vsub.f32 %v1570, %v1675
    %v1687 = vsub.f32 %v1571, %v1677
    %v1688 = vsub.f32 %v1572, %v1679
    %v1689 = vsub.f32 %v1573, %v1681
    %1691 = vset.pattern.permute.xlu0 0
    %1692 = vperm.xlu0 %1691, %v1662
    %v1693 = vpop.permute.xlu0 %1692
    %1696 = vset.pattern.permute.xlu0 0
    %1697 = vperm.xlu0 %1696, %v1663
    %v1698 = vpop.permute.xlu0 %1697
    %1701 = vset.pattern.permute.xlu0 0
    %1702 = vperm.xlu0 %1701, %v1664
    %v1703 = vpop.permute.xlu0 %1702
    %1706 = vset.pattern.permute.xlu0 0
    %1707 = vperm.xlu0 %1706, %v1665
    %v1708 = vpop.permute.xlu0 %1707
    %v1710 = vmul.f32 %v1562, %v1693
    %v1711 = vmul.f32 %v1563, %v1698
    %v1712 = vmul.f32 %v1564, %v1703
    %v1713 = vmul.f32 %v1565, %v1708
    %v1714 = vmul.f32 %v1566, %v1693
    %v1715 = vmul.f32 %v1567, %v1698
    %v1716 = vmul.f32 %v1568, %v1703
    %v1717 = vmul.f32 %v1569, %v1708
    %1719 = vset.pattern.permute.xlu0 1
    %1720 = vperm.xlu0 %1719, %v1686
    %v1721 = vpop.permute.xlu0 %1720
    %1724 = vset.pattern.permute.xlu0 1
    %1725 = vperm.xlu0 %1724, %v1687
    %v1726 = vpop.permute.xlu0 %1725
    %1729 = vset.pattern.permute.xlu0 1
    %1730 = vperm.xlu0 %1729, %v1688
    %v1731 = vpop.permute.xlu0 %1730
    %1734 = vset.pattern.permute.xlu0 1
    %1735 = vperm.xlu0 %1734, %v1689
    %v1736 = vpop.permute.xlu0 %1735
    %v1738 = vadd.f32 %v1710, %v1721
    %v1739 = vadd.f32 %v1711, %v1726
    %v1740 = vadd.f32 %v1712, %v1731
    %v1741 = vadd.f32 %v1713, %v1736
    %v1742 = vadd.f32 %v1714, %v1721
    %v1743 = vadd.f32 %v1715, %v1726
    %v1744 = vadd.f32 %v1716, %v1731
    %v1745 = vadd.f32 %v1717, %v1736
    %v1746 = vld [vmem:[%s3] sm:$0xff]
    %v1747 = vld [vmem:[%s3 + $0x8] sm:$0xff]
    %v1748 = vld [vmem:[%s3 + $0x10] sm:$0xff]
    %v1749 = vld [vmem:[%s3 + $0x18] sm:$0xff]
    %v1750 = vld [vmem:[%s6 + $0x4] sm:$0x1]
    %v1751 = vlaneseq
    %v1752 = vshrl.u32 %v1751, 7
    %v1753 = vsub.s32 0, %v1752
    %v1754 = vrot.slane %v1750, %v1753
    %v1756 = vsel %vm226, %v1738, 0
    %v1759 = vsel %vm226, %v1739, 0
    %v1762 = vsel %vm226, %v1740, 0
    %v1765 = vsel %vm226, %v1741, 0
    %v1768 = vsel %vm226, %v1742, 0
    %v1771 = vsel %vm226, %v1743, 0
    %v1774 = vsel %vm226, %v1744, 0
    %v1777 = vsel %vm226, %v1745, 0
    %1779 = vmatprep.subr.mxu0 0.0
    %1780 = vmatpush1.msra.mxu0 0.0
    %1781 = vmatprep.subr.mxu0 0.0
    %1782 = vmatpush1.msra.mxu0 0.0
    %1783 = vmatprep.subr.mxu0 0.0
    %1784 = vmatpush1.msra.mxu0 0.0
    %1785 = vmatprep.subr.mxu0 0.0
    %1786 = vmatpush1.msra.mxu0 0.0
    %1787 = vmatprep.subr.mxu0 0.0
    %1788 = vmatpush1.msra.mxu0 0.0
    %1789 = vmatprep.subr.mxu0 0.0
    %1790 = vmatpush1.msra.mxu0 0.0
    %1791 = vmatprep.subr.mxu0 0.0
    %1792 = vmatpush1.msra.mxu0 0.0
    %1793 = vmatprep.subr.mxu0 0.0
    %1794 = vmatpush1.msra.mxu0 0.0
    %1795 = vmatprep.subr.mxu0 0.0
    %1796 = vmatpush1.msra.mxu0 0.0
    %1797 = vmatprep.subr.mxu0 0.0
    %1798 = vmatpush1.msra.mxu0 0.0
    %1799 = vmatprep.subr.mxu0 0.0
    %1800 = vmatpush1.msra.mxu0 0.0
    %1801 = vmatprep.subr.mxu0 0.0
    %1802 = vmatpush1.msra.mxu0 0.0
    %1803 = vmatprep.subr.mxu0 0.0
    %1804 = vmatpush1.msra.mxu0 %v1749
    %1805 = vmatprep.subr.mxu0 0.0
    %1806 = vmatpush1.msra.mxu0 %v1748
    %1807 = vmatprep.subr.mxu0 0.0
    %1808 = vmatpush1.msra.mxu0 %v1747
    %1809 = vmatprep.subr.mxu0 0.0
    %1810 = vmatpush1.msra.mxu0 %v1746
    %1811 = vmatprep.subr.mxu0 0.0
    %1812 = vmatpush2.msra.mxu0 0.0
    %1813 = vmatprep.subr.mxu0 0.0
    %1814 = vmatpush2.msra.mxu0 0.0
    %1815 = vmatprep.subr.mxu0 0.0
    %1816 = vmatpush2.msra.mxu0 0.0
    %1817 = vmatprep.subr.mxu0 0.0
    %1818 = vmatpush2.msra.mxu0 0.0
    %1819 = vmatprep.subr.mxu0 0.0
    %1820 = vmatpush2.msra.mxu0 0.0
    %1821 = vmatprep.subr.mxu0 0.0
    %1822 = vmatpush2.msra.mxu0 0.0
    %1823 = vmatprep.subr.mxu0 0.0
    %1824 = vmatpush2.msra.mxu0 0.0
    %1825 = vmatprep.subr.mxu0 0.0
    %1826 = vmatpush2.msra.mxu0 0.0
    %1827 = vmatprep.subr.mxu0 0.0
    %1828 = vmatpush2.msra.mxu0 0.0
    %1829 = vmatprep.subr.mxu0 0.0
    %1830 = vmatpush2.msra.mxu0 0.0
    %1831 = vmatprep.subr.mxu0 0.0
    %1832 = vmatpush2.msra.mxu0 0.0
    %1833 = vmatprep.subr.mxu0 0.0
    %1834 = vmatpush2.msra.mxu0 0.0
    %1835 = vmatprep.subr.mxu0 0.0
    %1836 = vmatpush2.msra.mxu0 0.0
    %1837 = vmatprep.subr.mxu0 0.0
    %1838 = vmatpush2.msra.mxu0 0.0
    %1839 = vmatprep.subr.mxu0 0.0
    %1840 = vmatpush2.msra.mxu0 0.0
    %1841 = vmatprep.subr.mxu0 0.0
    %1842 = vmatpush2.msra.mxu0 0.0
    %1843 = vmatprep.mubr.f32.mxu0 0.0
    %1844 = vmatmul.mubr.f32.gmra.mxu0 %v1756
    %v1845 = vpop.f32.mrf.mxu0
    %v1846 = vadd.f32 %v1754, %v1845
    %v1847 = vpop.f32.mrf.mxu0
    %1848 = vmatprep.mubr.f32.mxu0 0.0
    %1849 = vmatmul.mubr.f32.gmra.mxu0 %v1759
    %v1850 = vpop.f32.mrf.mxu0
    %v1851 = vadd.f32 %v1754, %v1850
    %v1852 = vpop.f32.mrf.mxu0
    %1853 = vmatprep.mubr.f32.mxu0 0.0
    %1854 = vmatmul.mubr.f32.gmra.mxu0 %v1762
    %v1855 = vpop.f32.mrf.mxu0
    %v1856 = vadd.f32 %v1754, %v1855
    %v1857 = vpop.f32.mrf.mxu0
    %1858 = vmatprep.mubr.f32.mxu0 0.0
    %1859 = vmatmul.mubr.f32.gmra.mxu0 %v1765
    %v1860 = vpop.f32.mrf.mxu0
    %v1861 = vadd.f32 %v1754, %v1860
    %v1862 = vpop.f32.mrf.mxu0
    %1863 = vmatprep.mubr.f32.mxu0 0.0
    %1864 = vmatmul.mubr.f32.gmra.mxu0 %v1768
    %v1865 = vpop.f32.mrf.mxu0
    %v1866 = vadd.f32 %v1754, %v1865
    %v1867 = vpop.f32.mrf.mxu0
    %1868 = vmatprep.mubr.f32.mxu0 0.0
    %1869 = vmatmul.mubr.f32.gmra.mxu0 %v1771
    %v1870 = vpop.f32.mrf.mxu0
    %v1871 = vadd.f32 %v1754, %v1870
    %v1872 = vpop.f32.mrf.mxu0
    %1873 = vmatprep.mubr.f32.mxu0 0.0
    %1874 = vmatmul.mubr.f32.gmra.mxu0 %v1774
    %v1875 = vpop.f32.mrf.mxu0
    %v1876 = vadd.f32 %v1754, %v1875
    %v1877 = vpop.f32.mrf.mxu0
    %1878 = vmatprep.mubr.f32.mxu0 0.0
    %1879 = vmatmul.mubr.f32.gmra.mxu0 %v1777
    %v1880 = vpop.f32.mrf.mxu0
    %v1881 = vadd.f32 %v1754, %v1880
    %v1882 = vpop.f32.mrf.mxu0
    %1883 = vdwg.mxu0
    %vm1884 = vcmp.gt.f32.partialorder %v1846, 0.0
    %vm1885 = vcmp.gt.f32.partialorder %v1851, 0.0
    %vm1886 = vcmp.gt.f32.partialorder %v1856, 0.0
    %vm1887 = vcmp.gt.f32.partialorder %v1861, 0.0
    %vm1888 = vcmp.gt.f32.partialorder %v1866, 0.0
    %vm1889 = vcmp.gt.f32.partialorder %v1871, 0.0
    %vm1890 = vcmp.gt.f32.partialorder %v1876, 0.0
    %vm1891 = vcmp.gt.f32.partialorder %v1881, 0.0
    %v1892 = vmul.f32 %v1846, 0.01
    %v1893 = vmul.f32 %v1851, 0.01
    %v1894 = vmul.f32 %v1856, 0.01
    %v1895 = vmul.f32 %v1861, 0.01
    %v1896 = vmul.f32 %v1866, 0.01
    %v1897 = vmul.f32 %v1871, 0.01
    %v1898 = vmul.f32 %v1876, 0.01
    %v1899 = vmul.f32 %v1881, 0.01
    %v1900 = vsel %vm1884, %v1846, %v1892
    %v1901 = vsel %vm1885, %v1851, %v1893
    %v1902 = vsel %vm1886, %v1856, %v1894
    %v1903 = vsel %vm1887, %v1861, %v1895
    %v1904 = vsel %vm1888, %v1866, %v1896
    %v1905 = vsel %vm1889, %v1871, %v1897
    %v1906 = vsel %vm1890, %v1876, %v1898
    %v1907 = vsel %vm1891, %v1881, %v1899
    %v1908 = vld [vmem:[%s4] sm:$0xff]
    %v1909 = vld [vmem:[%s4 + $0x8] sm:$0xff]
    %v1910 = vld [vmem:[%s4 + $0x10] sm:$0xff]
    %v1911 = vld [vmem:[%s4 + $0x18] sm:$0xff]
    %v1912 = vld [vmem:[%s4 + $0x20] sm:$0xff]
    %v1913 = vld [vmem:[%s4 + $0x28] sm:$0xff]
    %v1914 = vld [vmem:[%s4 + $0x30] sm:$0xff]
    %v1915 = vld [vmem:[%s4 + $0x38] sm:$0xff]
    %v1916 = vld [vmem:[%s6 + $0x5] sm:$0x1]
    %v1917 = vlaneseq
    %v1918 = vshrl.u32 %v1917, 7
    %v1919 = vsub.s32 0, %v1918
    %v1920 = vrot.slane %v1916, %v1919
    %v1922 = vsel %vm87, %v1900, 0
    %v1925 = vsel %vm87, %v1901, 0
    %v1928 = vsel %vm87, %v1902, 0
    %v1931 = vsel %vm87, %v1903, 0
    %v1934 = vsel %vm87, %v1904, 0
    %v1937 = vsel %vm87, %v1905, 0
    %v1940 = vsel %vm87, %v1906, 0
    %v1943 = vsel %vm87, %v1907, 0
    %1945 = vmatprep.subr.mxu0 0.0
    %1946 = vmatpush1.msra.mxu0 0.0
    %1947 = vmatprep.subr.mxu0 0.0
    %1948 = vmatpush1.msra.mxu0 0.0
    %1949 = vmatprep.subr.mxu0 0.0
    %1950 = vmatpush1.msra.mxu0 0.0
    %1951 = vmatprep.subr.mxu0 0.0
    %1952 = vmatpush1.msra.mxu0 0.0
    %1953 = vmatprep.subr.mxu0 0.0
    %1954 = vmatpush1.msra.mxu0 0.0
    %1955 = vmatprep.subr.mxu0 0.0
    %1956 = vmatpush1.msra.mxu0 0.0
    %1957 = vmatprep.subr.mxu0 0.0
    %1958 = vmatpush1.msra.mxu0 0.0
    %1959 = vmatprep.subr.mxu0 0.0
    %1960 = vmatpush1.msra.mxu0 0.0
    %1961 = vmatprep.subr.mxu0 0.0
    %1962 = vmatpush1.msra.mxu0 %v1915
    %1963 = vmatprep.subr.mxu0 0.0
    %1964 = vmatpush1.msra.mxu0 %v1914
    %1965 = vmatprep.subr.mxu0 0.0
    %1966 = vmatpush1.msra.mxu0 %v1913
    %1967 = vmatprep.subr.mxu0 0.0
    %1968 = vmatpush1.msra.mxu0 %v1912
    %1969 = vmatprep.subr.mxu0 0.0
    %1970 = vmatpush1.msra.mxu0 %v1911
    %1971 = vmatprep.subr.mxu0 0.0
    %1972 = vmatpush1.msra.mxu0 %v1910
    %1973 = vmatprep.subr.mxu0 0.0
    %1974 = vmatpush1.msra.mxu0 %v1909
    %1975 = vmatprep.subr.mxu0 0.0
    %1976 = vmatpush1.msra.mxu0 %v1908
    %1977 = vmatprep.subr.mxu0 0.0
    %1978 = vmatpush2.msra.mxu0 0.0
    %1979 = vmatprep.subr.mxu0 0.0
    %1980 = vmatpush2.msra.mxu0 0.0
    %1981 = vmatprep.subr.mxu0 0.0
    %1982 = vmatpush2.msra.mxu0 0.0
    %1983 = vmatprep.subr.mxu0 0.0
    %1984 = vmatpush2.msra.mxu0 0.0
    %1985 = vmatprep.subr.mxu0 0.0
    %1986 = vmatpush2.msra.mxu0 0.0
    %1987 = vmatprep.subr.mxu0 0.0
    %1988 = vmatpush2.msra.mxu0 0.0
    %1989 = vmatprep.subr.mxu0 0.0
    %1990 = vmatpush2.msra.mxu0 0.0
    %1991 = vmatprep.subr.mxu0 0.0
    %1992 = vmatpush2.msra.mxu0 0.0
    %1993 = vmatprep.subr.mxu0 0.0
    %1994 = vmatpush2.msra.mxu0 0.0
    %1995 = vmatprep.subr.mxu0 0.0
    %1996 = vmatpush2.msra.mxu0 0.0
    %1997 = vmatprep.subr.mxu0 0.0
    %1998 = vmatpush2.msra.mxu0 0.0
    %1999 = vmatprep.subr.mxu0 0.0
    %2000 = vmatpush2.msra.mxu0 0.0
    %2001 = vmatprep.subr.mxu0 0.0
    %2002 = vmatpush2.msra.mxu0 0.0
    %2003 = vmatprep.subr.mxu0 0.0
    %2004 = vmatpush2.msra.mxu0 0.0
    %2005 = vmatprep.subr.mxu0 0.0
    %2006 = vmatpush2.msra.mxu0 0.0
    %2007 = vmatprep.subr.mxu0 0.0
    %2008 = vmatpush2.msra.mxu0 0.0
    %2009 = vmatprep.mubr.f32.mxu0 0.0
    %2010 = vmatmul.mubr.f32.gmra.mxu0 %v1922
    %v2011 = vpop.f32.mrf.mxu0
    %v2012 = vadd.f32 %v1920, %v2011
    %v2013 = vpop.f32.mrf.mxu0
    %2014 = vmatprep.mubr.f32.mxu0 0.0
    %2015 = vmatmul.mubr.f32.gmra.mxu0 %v1925
    %v2016 = vpop.f32.mrf.mxu0
    %v2017 = vadd.f32 %v1920, %v2016
    %v2018 = vpop.f32.mrf.mxu0
    %2019 = vmatprep.mubr.f32.mxu0 0.0
    %2020 = vmatmul.mubr.f32.gmra.mxu0 %v1928
    %v2021 = vpop.f32.mrf.mxu0
    %v2022 = vadd.f32 %v1920, %v2021
    %v2023 = vpop.f32.mrf.mxu0
    %2024 = vmatprep.mubr.f32.mxu0 0.0
    %2025 = vmatmul.mubr.f32.gmra.mxu0 %v1931
    %v2026 = vpop.f32.mrf.mxu0
    %v2027 = vadd.f32 %v1920, %v2026
    %v2028 = vpop.f32.mrf.mxu0
    %2029 = vmatprep.mubr.f32.mxu0 0.0
    %2030 = vmatmul.mubr.f32.gmra.mxu0 %v1934
    %v2031 = vpop.f32.mrf.mxu0
    %v2032 = vadd.f32 %v1920, %v2031
    %v2033 = vpop.f32.mrf.mxu0
    %2034 = vmatprep.mubr.f32.mxu0 0.0
    %2035 = vmatmul.mubr.f32.gmra.mxu0 %v1937
    %v2036 = vpop.f32.mrf.mxu0
    %v2037 = vadd.f32 %v1920, %v2036
    %v2038 = vpop.f32.mrf.mxu0
    %2039 = vmatprep.mubr.f32.mxu0 0.0
    %2040 = vmatmul.mubr.f32.gmra.mxu0 %v1940
    %v2041 = vpop.f32.mrf.mxu0
    %v2042 = vadd.f32 %v1920, %v2041
    %v2043 = vpop.f32.mrf.mxu0
    %2044 = vmatprep.mubr.f32.mxu0 0.0
    %2045 = vmatmul.mubr.f32.gmra.mxu0 %v1943
    %v2046 = vpop.f32.mrf.mxu0
    %v2047 = vadd.f32 %v1920, %v2046
    %v2048 = vpop.f32.mrf.mxu0
    %2049 = vdwg.mxu0
    %v2050 = vadd.f32 %v2012, %v1738
    %v2051 = vadd.f32 %v2017, %v1739
    %v2052 = vadd.f32 %v2022, %v1740
    %v2053 = vadd.f32 %v2027, %v1741
    %v2054 = vadd.f32 %v2032, %v1742
    %v2055 = vadd.f32 %v2037, %v1743
    %v2056 = vadd.f32 %v2042, %v1744
    %v2057 = vadd.f32 %v2047, %v1745
    %v2058 = vsel %vm226, %v2050, 0.0
    %2059 = vadd.xlane.f32.xlu0 %v2058
    %v2060 = vpop.xlane.xlu0 %2059
    %v2061 = vsel %vm226, %v2051, 0.0
    %2062 = vadd.xlane.f32.xlu0 %v2061
    %v2063 = vpop.xlane.xlu0 %2062
    %v2064 = vsel %vm226, %v2052, 0.0
    %2065 = vadd.xlane.f32.xlu0 %v2064
    %v2066 = vpop.xlane.xlu0 %2065
    %v2067 = vsel %vm226, %v2053, 0.0
    %2068 = vadd.xlane.f32.xlu0 %v2067
    %v2069 = vpop.xlane.xlu0 %2068
    %v2070 = vsel %vm226, %v2054, 0.0
    %2071 = vadd.xlane.f32.xlu0 %v2070
    %v2072 = vpop.xlane.xlu0 %2071
    %v2073 = vsel %vm226, %v2055, 0.0
    %2074 = vadd.xlane.f32.xlu0 %v2073
    %v2075 = vpop.xlane.xlu0 %2074
    %v2076 = vsel %vm226, %v2056, 0.0
    %2077 = vadd.xlane.f32.xlu0 %v2076
    %v2078 = vpop.xlane.xlu0 %2077
    %v2079 = vsel %vm226, %v2057, 0.0
    %2080 = vadd.xlane.f32.xlu0 %v2079
    %v2081 = vpop.xlane.xlu0 %2080
    %v2082 = vadd.f32 %v2060, %v2072
    %v2083 = vadd.f32 %v2063, %v2075
    %v2084 = vadd.f32 %v2066, %v2078
    %v2085 = vadd.f32 %v2069, %v2081
    %v2086 = vmul.f32 %v2050, %v2050
    %v2087 = vmul.f32 %v2051, %v2051
    %v2088 = vmul.f32 %v2052, %v2052
    %v2089 = vmul.f32 %v2053, %v2053
    %v2090 = vmul.f32 %v2054, %v2054
    %v2091 = vmul.f32 %v2055, %v2055
    %v2092 = vmul.f32 %v2056, %v2056
    %v2093 = vmul.f32 %v2057, %v2057
    %v2094 = vsel %vm226, %v2086, 0.0
    %2095 = vadd.xlane.f32.xlu0 %v2094
    %v2096 = vpop.xlane.xlu0 %2095
    %v2097 = vsel %vm226, %v2087, 0.0
    %2098 = vadd.xlane.f32.xlu0 %v2097
    %v2099 = vpop.xlane.xlu0 %2098
    %v2100 = vsel %vm226, %v2088, 0.0
    %2101 = vadd.xlane.f32.xlu0 %v2100
    %v2102 = vpop.xlane.xlu0 %2101
    %v2103 = vsel %vm226, %v2089, 0.0
    %2104 = vadd.xlane.f32.xlu0 %v2103
    %v2105 = vpop.xlane.xlu0 %2104
    %v2106 = vsel %vm226, %v2090, 0.0
    %2107 = vadd.xlane.f32.xlu0 %v2106
    %v2108 = vpop.xlane.xlu0 %2107
    %v2109 = vsel %vm226, %v2091, 0.0
    %2110 = vadd.xlane.f32.xlu0 %v2109
    %v2111 = vpop.xlane.xlu0 %2110
    %v2112 = vsel %vm226, %v2092, 0.0
    %2113 = vadd.xlane.f32.xlu0 %v2112
    %v2114 = vpop.xlane.xlu0 %2113
    %v2115 = vsel %vm226, %v2093, 0.0
    %2116 = vadd.xlane.f32.xlu0 %v2115
    %v2117 = vpop.xlane.xlu0 %2116
    %v2118 = vadd.f32 %v2096, %v2108
    %v2119 = vadd.f32 %v2099, %v2111
    %v2120 = vadd.f32 %v2102, %v2114
    %v2121 = vadd.f32 %v2105, %v2117
    %v2122 = vmul.f32 %v2082, 0.015625
    %v2123 = vmul.f32 %v2083, 0.015625
    %v2124 = vmul.f32 %v2084, 0.015625
    %v2125 = vmul.f32 %v2085, 0.015625
    %v2126 = vmul.f32 %v2118, 0.015625
    %v2127 = vmul.f32 %v2119, 0.015625
    %v2128 = vmul.f32 %v2120, 0.015625
    %v2129 = vmul.f32 %v2121, 0.015625
    %v2130 = vmul.f32 %v2122, %v2122
    %v2131 = vmul.f32 %v2123, %v2123
    %v2132 = vmul.f32 %v2124, %v2124
    %v2133 = vmul.f32 %v2125, %v2125
    %v2134 = vsub.f32 %v2126, %v2130
    %v2135 = vsub.f32 %v2127, %v2131
    %v2136 = vsub.f32 %v2128, %v2132
    %v2137 = vsub.f32 %v2129, %v2133
    %v2138 = vadd.f32 %v2134, 1e-05
    %v2139 = vadd.f32 %v2135, 1e-05
    %v2140 = vadd.f32 %v2136, 1e-05
    %v2141 = vadd.f32 %v2137, 1e-05
    %v2142 = vrsqrt.pop %v2138
    %v2143 = vrsqrt.pop %v2139
    %v2144 = vrsqrt.pop %v2140
    %v2145 = vrsqrt.pop %v2141
    %v2146 = vmul.f32 %v2142, %v1570
    %v2147 = vmul.f32 %v2143, %v1571
    %v2148 = vmul.f32 %v2144, %v1572
    %v2149 = vmul.f32 %v2145, %v1573
    %v2150 = vmul.f32 %v2122, %v2146
    %v2151 = vmul.f32 %v2123, %v2147
    %v2152 = vmul.f32 %v2124, %v2148
    %v2153 = vmul.f32 %v2125, %v2149
    %2158 = vrot.lane.b32.xlu0 %v2150, 1
    %v2159 = vpop.permute.xlu0 %2158
    %2160 = vrot.lane.b32.xlu0 %v2151, 1
    %v2161 = vpop.permute.xlu0 %2160
    %2162 = vrot.lane.b32.xlu0 %v2152, 1
    %v2163 = vpop.permute.xlu0 %2162
    %2164 = vrot.lane.b32.xlu0 %v2153, 1
    %v2165 = vpop.permute.xlu0 %2164
    %v2170 = vsub.f32 %v1570, %v2159
    %v2171 = vsub.f32 %v1571, %v2161
    %v2172 = vsub.f32 %v1572, %v2163
    %v2173 = vsub.f32 %v1573, %v2165
    %2175 = vset.pattern.permute.xlu0 2
    %2176 = vperm.xlu0 %2175, %v2146
    %v2177 = vpop.permute.xlu0 %2176
    %2180 = vset.pattern.permute.xlu0 2
    %2181 = vperm.xlu0 %2180, %v2147
    %v2182 = vpop.permute.xlu0 %2181
    %2185 = vset.pattern.permute.xlu0 2
    %2186 = vperm.xlu0 %2185, %v2148
    %v2187 = vpop.permute.xlu0 %2186
    %2190 = vset.pattern.permute.xlu0 2
    %2191 = vperm.xlu0 %2190, %v2149
    %v2192 = vpop.permute.xlu0 %2191
    %v2194 = vmul.f32 %v2050, %v2177
    %v2195 = vmul.f32 %v2051, %v2182
    %v2196 = vmul.f32 %v2052, %v2187
    %v2197 = vmul.f32 %v2053, %v2192
    %v2198 = vmul.f32 %v2054, %v2177
    %v2199 = vmul.f32 %v2055, %v2182
    %v2200 = vmul.f32 %v2056, %v2187
    %v2201 = vmul.f32 %v2057, %v2192
    %2203 = vset.pattern.permute.xlu0 3
    %2204 = vperm.xlu0 %2203, %v2170
    %v2205 = vpop.permute.xlu0 %2204
    %2208 = vset.pattern.permute.xlu0 3
    %2209 = vperm.xlu0 %2208, %v2171
    %v2210 = vpop.permute.xlu0 %2209
    %2213 = vset.pattern.permute.xlu0 3
    %2214 = vperm.xlu0 %2213, %v2172
    %v2215 = vpop.permute.xlu0 %2214
    %2218 = vset.pattern.permute.xlu0 3
    %2219 = vperm.xlu0 %2218, %v2173
    %v2220 = vpop.permute.xlu0 %2219
    %v2222 = vadd.f32 %v2194, %v2205
    %v2223 = vadd.f32 %v2195, %v2210
    %v2224 = vadd.f32 %v2196, %v2215
    %v2225 = vadd.f32 %v2197, %v2220
    %v2226 = vadd.f32 %v2198, %v2205
    %v2227 = vadd.f32 %v2199, %v2210
    %v2228 = vadd.f32 %v2200, %v2215
    %v2229 = vadd.f32 %v2201, %v2220
    %s2230 = scalar_lea.vmem [#allocation5], 128
    %v2231 = vld [vmem:[%s2230] sm:$0xff]
    %v2232 = vld [vmem:[%s2230 + $0x8] sm:$0xff]
    %v2233 = vld [vmem:[%s2230 + $0x10] sm:$0xff]
    %v2234 = vld [vmem:[%s2230 + $0x18] sm:$0xff]
    %v2236 = vsel %vm226, %v2222, 0
    %v2239 = vsel %vm226, %v2223, 0
    %v2242 = vsel %vm226, %v2224, 0
    %v2245 = vsel %vm226, %v2225, 0
    %v2248 = vsel %vm226, %v2226, 0
    %v2251 = vsel %vm226, %v2227, 0
    %v2254 = vsel %vm226, %v2228, 0
    %v2257 = vsel %vm226, %v2229, 0
    %2259 = vmatprep.subr.mxu0 0.0
    %2260 = vmatpush1.msra.mxu0 0.0
    %2261 = vmatprep.subr.mxu0 0.0
    %2262 = vmatpush1.msra.mxu0 0.0
    %2263 = vmatprep.subr.mxu0 0.0
    %2264 = vmatpush1.msra.mxu0 0.0
    %2265 = vmatprep.subr.mxu0 0.0
    %2266 = vmatpush1.msra.mxu0 0.0
    %2267 = vmatprep.subr.mxu0 0.0
    %2268 = vmatpush1.msra.mxu0 0.0
    %2269 = vmatprep.subr.mxu0 0.0
    %2270 = vmatpush1.msra.mxu0 0.0
    %2271 = vmatprep.subr.mxu0 0.0
    %2272 = vmatpush1.msra.mxu0 0.0
    %2273 = vmatprep.subr.mxu0 0.0
    %2274 = vmatpush1.msra.mxu0 0.0
    %2275 = vmatprep.subr.mxu0 0.0
    %2276 = vmatpush1.msra.mxu0 0.0
    %2277 = vmatprep.subr.mxu0 0.0
    %2278 = vmatpush1.msra.mxu0 0.0
    %2279 = vmatprep.subr.mxu0 0.0
    %2280 = vmatpush1.msra.mxu0 0.0
    %2281 = vmatprep.subr.mxu0 0.0
    %2282 = vmatpush1.msra.mxu0 0.0
    %2283 = vmatprep.subr.mxu0 0.0
    %2284 = vmatpush1.msra.mxu0 %v2234
    %2285 = vmatprep.subr.mxu0 0.0
    %2286 = vmatpush1.msra.mxu0 %v2233
    %2287 = vmatprep.subr.mxu0 0.0
    %2288 = vmatpush1.msra.mxu0 %v2232
    %2289 = vmatprep.subr.mxu0 0.0
    %2290 = vmatpush1.msra.mxu0 %v2231
    %2291 = vmatprep.subr.mxu0 0.0
    %2292 = vmatpush2.msra.mxu0 0.0
    %2293 = vmatprep.subr.mxu0 0.0
    %2294 = vmatpush2.msra.mxu0 0.0
    %2295 = vmatprep.subr.mxu0 0.0
    %2296 = vmatpush2.msra.mxu0 0.0
    %2297 = vmatprep.subr.mxu0 0.0
    %2298 = vmatpush2.msra.mxu0 0.0
    %2299 = vmatprep.subr.mxu0 0.0
    %2300 = vmatpush2.msra.mxu0 0.0
    %2301 = vmatprep.subr.mxu0 0.0
    %2302 = vmatpush2.msra.mxu0 0.0
    %2303 = vmatprep.subr.mxu0 0.0
    %2304 = vmatpush2.msra.mxu0 0.0
    %2305 = vmatprep.subr.mxu0 0.0
    %2306 = vmatpush2.msra.mxu0 0.0
    %2307 = vmatprep.subr.mxu0 0.0
    %2308 = vmatpush2.msra.mxu0 0.0
    %2309 = vmatprep.subr.mxu0 0.0
    %2310 = vmatpush2.msra.mxu0 0.0
    %2311 = vmatprep.subr.mxu0 0.0
    %2312 = vmatpush2.msra.mxu0 0.0
    %2313 = vmatprep.subr.mxu0 0.0
    %2314 = vmatpush2.msra.mxu0 0.0
    %2315 = vmatprep.subr.mxu0 0.0
    %2316 = vmatpush2.msra.mxu0 0.0
    %2317 = vmatprep.subr.mxu0 0.0
    %2318 = vmatpush2.msra.mxu0 0.0
    %2319 = vmatprep.subr.mxu0 0.0
    %2320 = vmatpush2.msra.mxu0 0.0
    %2321 = vmatprep.subr.mxu0 0.0
    %2322 = vmatpush2.msra.mxu0 0.0
    %2323 = vmatprep.mubr.f32.mxu0 0.0
    %2324 = vmatmul.mubr.f32.gmra.mxu0 %v2236
    %v2325 = vpop.f32.mrf.mxu0
    %v2326 = vadd.f32 0.0, %v2325
    %v2327 = vpop.f32.mrf.mxu0
    %2328 = vmatprep.mubr.f32.mxu0 0.0
    %2329 = vmatmul.mubr.f32.gmra.mxu0 %v2239
    %v2330 = vpop.f32.mrf.mxu0
    %v2331 = vadd.f32 0.0, %v2330
    %v2332 = vpop.f32.mrf.mxu0
    %2333 = vmatprep.mubr.f32.mxu0 0.0
    %2334 = vmatmul.mubr.f32.gmra.mxu0 %v2242
    %v2335 = vpop.f32.mrf.mxu0
    %v2336 = vadd.f32 0.0, %v2335
    %v2337 = vpop.f32.mrf.mxu0
    %2338 = vmatprep.mubr.f32.mxu0 0.0
    %2339 = vmatmul.mubr.f32.gmra.mxu0 %v2245
    %v2340 = vpop.f32.mrf.mxu0
    %v2341 = vadd.f32 0.0, %v2340
    %v2342 = vpop.f32.mrf.mxu0
    %2343 = vmatprep.mubr.f32.mxu0 0.0
    %2344 = vmatmul.mubr.f32.gmra.mxu0 %v2248
    %v2345 = vpop.f32.mrf.mxu0
    %v2346 = vadd.f32 0.0, %v2345
    %v2347 = vpop.f32.mrf.mxu0
    %2348 = vmatprep.mubr.f32.mxu0 0.0
    %2349 = vmatmul.mubr.f32.gmra.mxu0 %v2251
    %v2350 = vpop.f32.mrf.mxu0
    %v2351 = vadd.f32 0.0, %v2350
    %v2352 = vpop.f32.mrf.mxu0
    %2353 = vmatprep.mubr.f32.mxu0 0.0
    %2354 = vmatmul.mubr.f32.gmra.mxu0 %v2254
    %v2355 = vpop.f32.mrf.mxu0
    %v2356 = vadd.f32 0.0, %v2355
    %v2357 = vpop.f32.mrf.mxu0
    %2358 = vmatprep.mubr.f32.mxu0 0.0
    %2359 = vmatmul.mubr.f32.gmra.mxu0 %v2257
    %v2360 = vpop.f32.mrf.mxu0
    %v2361 = vadd.f32 0.0, %v2360
    %v2362 = vpop.f32.mrf.mxu0
    %2363 = vdwg.mxu0
    %s2364 = scalar_lea.vmem [#allocation2], 64
    %v2365 = vld [vmem:[%s2364] sm:$0xff]
    %v2366 = vld [vmem:[%s2364 + $0x8] sm:$0xff]
    %v2367 = vld [vmem:[%s2364 + $0x10] sm:$0xff]
    %v2368 = vld [vmem:[%s2364 + $0x18] sm:$0xff]
    %v2369 = vld [vmem:[%s2364 + $0x20] sm:$0xff]
    %v2370 = vld [vmem:[%s2364 + $0x28] sm:$0xff]
    %v2371 = vld [vmem:[%s2364 + $0x30] sm:$0xff]
    %v2372 = vld [vmem:[%s2364 + $0x38] sm:$0xff]
    %v2373 = vld [vmem:[%s6 + $0x6] sm:$0x1]
    %v2374 = vlaneseq
    %v2375 = vshrl.u32 %v2374, 7
    %v2376 = vsub.s32 0, %v2375
    %v2377 = vrot.slane %v2373, %v2376
    %v2379 = vsel %vm87, %v2365, 0
    %v2382 = vsel %vm87, %v2366, 0
    %v2385 = vsel %vm87, %v2367, 0
    %v2388 = vsel %vm87, %v2368, 0
    %v2391 = vsel %vm87, %v2369, 0
    %v2394 = vsel %vm87, %v2370, 0
    %v2397 = vsel %vm87, %v2371, 0
    %v2400 = vsel %vm87, %v2372, 0
    %2402 = vmatprep.subr.mxu0 0.0
    %2403 = vmatpush1.msra.mxu0 0.0
    %2404 = vmatprep.subr.mxu0 0.0
    %2405 = vmatpush1.msra.mxu0 0.0
    %2406 = vmatprep.subr.mxu0 0.0
    %2407 = vmatpush1.msra.mxu0 0.0
    %2408 = vmatprep.subr.mxu0 0.0
    %2409 = vmatpush1.msra.mxu0 0.0
    %2410 = vmatprep.subr.mxu0 0.0
    %2411 = vmatpush1.msra.mxu0 0.0
    %2412 = vmatprep.subr.mxu0 0.0
    %2413 = vmatpush1.msra.mxu0 0.0
    %2414 = vmatprep.subr.mxu0 0.0
    %2415 = vmatpush1.msra.mxu0 0.0
    %2416 = vmatprep.subr.mxu0 0.0
    %2417 = vmatpush1.msra.mxu0 0.0
    %2418 = vmatprep.subr.mxu0 0.0
    %2419 = vmatpush1.msra.mxu0 %v2361
    %2420 = vmatprep.subr.mxu0 0.0
    %2421 = vmatpush1.msra.mxu0 %v2356
    %2422 = vmatprep.subr.mxu0 0.0
    %2423 = vmatpush1.msra.mxu0 %v2351
    %2424 = vmatprep.subr.mxu0 0.0
    %2425 = vmatpush1.msra.mxu0 %v2346
    %2426 = vmatprep.subr.mxu0 0.0
    %2427 = vmatpush1.msra.mxu0 %v2341
    %2428 = vmatprep.subr.mxu0 0.0
    %2429 = vmatpush1.msra.mxu0 %v2336
    %2430 = vmatprep.subr.mxu0 0.0
    %2431 = vmatpush1.msra.mxu0 %v2331
    %2432 = vmatprep.subr.mxu0 0.0
    %2433 = vmatpush1.msra.mxu0 %v2326
    %2434 = vmatprep.subr.mxu0 0.0
    %2435 = vmatpush2.msra.mxu0 0.0
    %2436 = vmatprep.subr.mxu0 0.0
    %2437 = vmatpush2.msra.mxu0 0.0
    %2438 = vmatprep.subr.mxu0 0.0
    %2439 = vmatpush2.msra.mxu0 0.0
    %2440 = vmatprep.subr.mxu0 0.0
    %2441 = vmatpush2.msra.mxu0 0.0
    %2442 = vmatprep.subr.mxu0 0.0
    %2443 = vmatpush2.msra.mxu0 0.0
    %2444 = vmatprep.subr.mxu0 0.0
    %2445 = vmatpush2.msra.mxu0 0.0
    %2446 = vmatprep.subr.mxu0 0.0
    %2447 = vmatpush2.msra.mxu0 0.0
    %2448 = vmatprep.subr.mxu0 0.0
    %2449 = vmatpush2.msra.mxu0 0.0
    %2450 = vmatprep.subr.mxu0 0.0
    %2451 = vmatpush2.msra.mxu0 0.0
    %2452 = vmatprep.subr.mxu0 0.0
    %2453 = vmatpush2.msra.mxu0 0.0
    %2454 = vmatprep.subr.mxu0 0.0
    %2455 = vmatpush2.msra.mxu0 0.0
    %2456 = vmatprep.subr.mxu0 0.0
    %2457 = vmatpush2.msra.mxu0 0.0
    %2458 = vmatprep.subr.mxu0 0.0
    %2459 = vmatpush2.msra.mxu0 0.0
    %2460 = vmatprep.subr.mxu0 0.0
    %2461 = vmatpush2.msra.mxu0 0.0
    %2462 = vmatprep.subr.mxu0 0.0
    %2463 = vmatpush2.msra.mxu0 0.0
    %2464 = vmatprep.subr.mxu0 0.0
    %2465 = vmatpush2.msra.mxu0 0.0
    %2466 = vmatprep.mubr.f32.mxu0 0.0
    %2467 = vmatmul.mubr.f32.gmra.mxu0 %v2379
    %v2468 = vpop.f32.mrf.mxu0
    %v2469 = vadd.f32 %v2377, %v2468
    %v2470 = vpop.f32.mrf.mxu0
    %2471 = vmatprep.mubr.f32.mxu0 0.0
    %2472 = vmatmul.mubr.f32.gmra.mxu0 %v2382
    %v2473 = vpop.f32.mrf.mxu0
    %v2474 = vadd.f32 %v2377, %v2473
    %v2475 = vpop.f32.mrf.mxu0
    %2476 = vmatprep.mubr.f32.mxu0 0.0
    %2477 = vmatmul.mubr.f32.gmra.mxu0 %v2385
    %v2478 = vpop.f32.mrf.mxu0
    %v2479 = vadd.f32 %v2377, %v2478
    %v2480 = vpop.f32.mrf.mxu0
    %2481 = vmatprep.mubr.f32.mxu0 0.0
    %2482 = vmatmul.mubr.f32.gmra.mxu0 %v2388
    %v2483 = vpop.f32.mrf.mxu0
    %v2484 = vadd.f32 %v2377, %v2483
    %v2485 = vpop.f32.mrf.mxu0
    %2486 = vmatprep.mubr.f32.mxu0 0.0
    %2487 = vmatmul.mubr.f32.gmra.mxu0 %v2391
    %v2488 = vpop.f32.mrf.mxu0
    %v2489 = vadd.f32 %v2377, %v2488
    %v2490 = vpop.f32.mrf.mxu0
    %2491 = vmatprep.mubr.f32.mxu0 0.0
    %2492 = vmatmul.mubr.f32.gmra.mxu0 %v2394
    %v2493 = vpop.f32.mrf.mxu0
    %v2494 = vadd.f32 %v2377, %v2493
    %v2495 = vpop.f32.mrf.mxu0
    %2496 = vmatprep.mubr.f32.mxu0 0.0
    %2497 = vmatmul.mubr.f32.gmra.mxu0 %v2397
    %v2498 = vpop.f32.mrf.mxu0
    %v2499 = vadd.f32 %v2377, %v2498
    %v2500 = vpop.f32.mrf.mxu0
    %2501 = vmatprep.mubr.f32.mxu0 0.0
    %2502 = vmatmul.mubr.f32.gmra.mxu0 %v2400
    %v2503 = vpop.f32.mrf.mxu0
    %v2504 = vadd.f32 %v2377, %v2503
    %v2505 = vpop.f32.mrf.mxu0
    %2506 = vdwg.mxu0
    %2507 = vst.msk [vmem:[#allocation8] sm:$0xff] %vm226, %v2469
    %2508 = vst.msk [vmem:[#allocation8 + $0x8] sm:$0xff] %vm226, %v2474
    %2509 = vst.msk [vmem:[#allocation8 + $0x10] sm:$0xff] %vm226, %v2479
    %2510 = vst.msk [vmem:[#allocation8 + $0x18] sm:$0xff] %vm226, %v2484
    %2511 = vst.msk [vmem:[#allocation8 + $0x20] sm:$0xff] %vm226, %v2489
    %2512 = vst.msk [vmem:[#allocation8 + $0x28] sm:$0xff] %vm226, %v2494
    %2513 = vst.msk [vmem:[#allocation8 + $0x30] sm:$0xff] %vm226, %v2499
    %2514 = vst.msk [vmem:[#allocation8 + $0x38] sm:$0xff] %vm226, %v2504
    // Predicated region
    $region46: #{encoder_forward.1} parent=1 // pred_check
      _
    $region47: #{encoder_forward.1} parent=1 // pred_check_branch
      %2516 = sbr.rel (0) target = $region49
    $region48: #{encoder_forward.1} parent=1 // pred_region
      %s2518 = ssub.s32 1024, 1024
      %2519 = vsyncadd [#allocation4], %s2518
      %s2520 = sshll.u32 [#allocation8], 4
      %s2521 = int_to_ptr.vmem [resolvable:$true] %s2520
      %2526 = dma.vmem_to_hbm [thread:$0]  %s2521, 1024, %s8, [#allocation4], 128, 128, 8
    $region49: #{encoder_forward.1} parent=1 // pred_fallthru
      _
    // Predicated region
    $region50: #{encoder_forward.1} parent=1 // pred_check
      _
    $region51: #{encoder_forward.1} parent=1 // pred_check_branch
      %2528 = sbr.rel (0) target = $region53
    $region52: #{encoder_forward.1} parent=1 // pred_region
      %2529 = dma.done [#allocation4], 1024
    $region53: #{encoder_forward.1} parent=1 // pred_fallthru
      _
    %2530 = vsyncpa [#allocation3], 1
    %2531 = vsyncpa [#allocation6], 1
    %2532 = vsyncpa [#allocation4], 1

</llo_original>
